<compile_context>
chip_gen: v5e
topology: v5e:2x2
jax: 0.10.0
libtpu: 0.0.40
codegen_flags: <defaults>
</compile_context>

<pallas_src>
import jax
import jax.numpy as jnp
from jax import lax
from jax.experimental import pallas as pl
from jax.experimental.pallas import tpu as pltpu


def _sa_kernel(x_ref, w1t_ref, b1t_ref, w2_ref, b2_ref, w3_ref, b3_ref,
               w4_ref, b4_ref, o_ref):
    # x_ref: (1, C, L) block for the current batch element.
    # o_ref: (1, C, TJ) block for the current (batch, column-block).
    C, L = x_ref.shape[1], x_ref.shape[2]
    TJ = o_ref.shape[2]
    j = pl.program_id(1)
    start = pl.multiple_of(j * TJ, TJ)

    x = x_ref[0]                            # (C, L)   channels x spatial
    xj = x_ref[0, :, pl.ds(start, TJ)]      # (C, TJ)  this column block

    # --- 1x1 conv projections (per-pixel matmuls on the MXU) ---
    # f in (L, Cr) layout (query-side), g/h in (Cr, *) layout (key/value-side).
    ft = jnp.dot(x.T, w1t_ref[...],
                 preferred_element_type=jnp.float32) + b1t_ref[...]       # (L, Cr)
    gj = jnp.dot(w2_ref[...], xj,
                 preferred_element_type=jnp.float32) + b2_ref[...]        # (Cr, TJ)
    h = jnp.dot(w3_ref[...], x,
                preferred_element_type=jnp.float32) + b3_ref[...]         # (Cr, L)

    # --- attention scores: s[i, j] = sum_c f[c, i] * g[c, j] ---
    s = jnp.dot(ft, gj, preferred_element_type=jnp.float32)               # (L, TJ)

    # --- softmax over dim=1 of the (B, L, L) tensor == over rows i here ---
    m = jnp.max(s, axis=0, keepdims=True)                                 # (1, TJ)
    e = jnp.exp(s - m)
    inv = 1.0 / jnp.sum(e, axis=0, keepdims=True)                         # (1, TJ)
    beta = e * inv                                                        # (L, TJ)

    # --- apply attention and output projection ---
    att = jnp.dot(h, beta, preferred_element_type=jnp.float32)            # (Cr, TJ)
    o = jnp.dot(w4_ref[...], att,
                preferred_element_type=jnp.float32) + b4_ref[...]         # (C, TJ)

    # residual
    o_ref[0] = (o + xj).astype(o_ref.dtype)


def _pick_col_tile(L):
    for t in (512, 256, 128):
        if L % t == 0:
            return t
    return L


def sa_module(x_nchw, params):
    """SAmodule forward. x_nchw: (B, C, m, n) float32. params in PyTorch layout."""
    w1, b1, w2, b2, w3, b3, w4, b4 = params   # w1/w2/w3: (Cr, C), w4: (C, Cr)
    B, C, m, n = x_nchw.shape
    Cr = w1.shape[0]
    L = m * n
    TJ = _pick_col_tile(L)
    nJ = L // TJ

    xf = x_nchw.reshape(B, C, L).astype(jnp.float32)     # no transpose, reshape only

    # Kernel-side parameter layouts (free host-side reshapes/transposes).
    w1t = jnp.transpose(w1).astype(jnp.float32)          # (C, Cr)
    b1t = b1.reshape(1, Cr).astype(jnp.float32)
    w2k = w2.astype(jnp.float32)                         # (Cr, C)
    b2k = b2.reshape(Cr, 1).astype(jnp.float32)
    w3k = w3.astype(jnp.float32)                         # (Cr, C)
    b3k = b3.reshape(Cr, 1).astype(jnp.float32)
    w4k = w4.astype(jnp.float32)                         # (C, Cr)
    b4k = b4.reshape(C, 1).astype(jnp.float32)

    flops = B * nJ * (2 * L * C * Cr          # f projection
                      + 2 * Cr * C * L        # h projection
                      + 2 * Cr * C * TJ       # g projection (block)
                      + 2 * L * Cr * TJ       # scores
                      + 2 * Cr * L * TJ       # attention apply
                      + 2 * C * Cr * TJ)      # output projection
    transcendentals = B * nJ * L * TJ
    bytes_accessed = 4 * (2 * B * C * L + 4 * C * Cr + 3 * Cr + C)

    out = pl.pallas_call(
        _sa_kernel,
        out_shape=jax.ShapeDtypeStruct((B, C, L), jnp.float32),
        grid=(B, nJ),
        in_specs=[
            pl.BlockSpec((1, C, L), lambda b, j: (b, 0, 0)),   # x (full spatial row)
            pl.BlockSpec((C, Cr), lambda b, j: (0, 0)),        # w1^T
            pl.BlockSpec((1, Cr), lambda b, j: (0, 0)),        # b1
            pl.BlockSpec((Cr, C), lambda b, j: (0, 0)),        # w2
            pl.BlockSpec((Cr, 1), lambda b, j: (0, 0)),        # b2
            pl.BlockSpec((Cr, C), lambda b, j: (0, 0)),        # w3
            pl.BlockSpec((Cr, 1), lambda b, j: (0, 0)),        # b3
            pl.BlockSpec((C, Cr), lambda b, j: (0, 0)),        # w4
            pl.BlockSpec((C, 1), lambda b, j: (0, 0)),         # b4
        ],
        out_specs=pl.BlockSpec((1, C, TJ), lambda b, j: (b, 0, j)),
        compiler_params=pltpu.CompilerParams(
            dimension_semantics=("parallel", "parallel"),
            vmem_limit_bytes=48 * 1024 * 1024),
        cost_estimate=pl.CostEstimate(
            flops=flops, transcendentals=transcendentals,
            bytes_accessed=bytes_accessed),
    )(xf, w1t, b1t, w2k, b2k, w3k, b3k, w4k, b4k)

    return out.reshape(B, C, m, n)


def _reference(x_nchw, params):
    """Pure-JAX reference of the PyTorch SAmodule forward (NCHW in/out)."""
    w1, b1, w2, b2, w3, b3, w4, b4 = params
    B, C, m, n = x_nchw.shape
    L = m * n
    xf = x_nchw.reshape(B, C, L).astype(jnp.float32)
    hp = lax.Precision.HIGHEST

    def conv1x1(w, b):
        return jnp.einsum('oc,bcl->bol', w, xf, precision=hp) + b[None, :, None]

    f = conv1x1(w1, b1)                                      # (B, Cr, L)
    g = conv1x1(w2, b2)
    h = conv1x1(w3, b3)
    s = jnp.einsum('bci,bcj->bij', f, g, precision=hp)        # (B, L, L)
    beta = jax.nn.softmax(s, axis=1)                          # softmax over dim=1
    att = jnp.einsum('bci,bij->bcj', h, beta, precision=hp)   # (B, Cr, L)
    o = jnp.einsum('oc,bcl->bol', w4, att,
                   precision=hp) + b4[None, :, None]          # (B, C, L)
    return (o + xf).reshape(B, C, m, n)


def _init_params(key, n_features, reduction):
    """Deterministic synthetic parameters in PyTorch (Cout, Cin) / (Cout,) layout."""
    Cr = n_features // reduction
    ks = jax.random.split(key, 8)

    def wmat(k, cout, cin):
        return 0.2 * jax.random.normal(k, (cout, cin), jnp.float32)

    def bvec(k, cout):
        return 0.1 * jax.random.normal(k, (cout,), jnp.float32)

    return (wmat(ks[0], Cr, n_features), bvec(ks[1], Cr),    # conv1
            wmat(ks[2], Cr, n_features), bvec(ks[3], Cr),    # conv2
            wmat(ks[4], Cr, n_features), bvec(ks[5], Cr),    # conv3
            wmat(ks[6], n_features, Cr), bvec(ks[7], n_features))  # conv4


if __name__ == "__main__":
    key = jax.random.PRNGKey(0)
    k_x, k_p = jax.random.split(key)

    B, n_features, reduction, H, W = 2, 32, 8, 16, 16
    x = jax.random.normal(k_x, (B, n_features, H, W), jnp.float32)
    params = _init_params(k_p, n_features, reduction)

    out = jax.block_until_ready(sa_module(x, params))
    ref = jax.block_until_ready(_reference(x, params))

    assert out.shape == (B, n_features, H, W), out.shape
    max_err = float(jnp.max(jnp.abs(out - ref)))
    assert jnp.allclose(out, ref, rtol=2e-4, atol=2e-4), max_err
    print("KERNEL_OK")
</pallas_src>

<mosaic_0001>
module attributes {stable_mosaic.version = 11 : i64} {
  func.func @_sa_kernel(%arg0: i32, %arg1: i32, %arg2: memref<1x32x256xf32, #tpu.memory_space<vmem>>, %arg3: memref<32x4xf32, #tpu.memory_space<vmem>>, %arg4: memref<1x4xf32, #tpu.memory_space<vmem>>, %arg5: memref<4x32xf32, #tpu.memory_space<vmem>>, %arg6: memref<4x1xf32, #tpu.memory_space<vmem>>, %arg7: memref<4x32xf32, #tpu.memory_space<vmem>>, %arg8: memref<4x1xf32, #tpu.memory_space<vmem>>, %arg9: memref<32x4xf32, #tpu.memory_space<vmem>>, %arg10: memref<32x1xf32, #tpu.memory_space<vmem>>, %arg11: memref<1x32x256xf32, #tpu.memory_space<vmem>>) attributes {dimension_semantics = [#tpu.dimension_semantics<parallel>, #tpu.dimension_semantics<parallel>], iteration_bounds = array<i64: 2, 1>, scalar_prefetch = 0 : i64, scratch_operands = 0 : i64, tpu.core_type = #tpu.core_type<tc>, window_params = [{transform_indices = @transform_0, window_bounds = array<i64: 1, 32, 256>}, {pipeline_mode = #tpu.pipeline_mode<synchronous>, transform_indices = @transform_1, window_bounds = array<i64: 32, 4>}, {pipeline_mode = #tpu.pipeline_mode<synchronous>, transform_indices = @transform_2, window_bounds = array<i64: 1, 4>}, {pipeline_mode = #tpu.pipeline_mode<synchronous>, transform_indices = @transform_3, window_bounds = array<i64: 4, 32>}, {pipeline_mode = #tpu.pipeline_mode<synchronous>, transform_indices = @transform_4, window_bounds = array<i64: 4, 1>}, {pipeline_mode = #tpu.pipeline_mode<synchronous>, transform_indices = @transform_5, window_bounds = array<i64: 4, 32>}, {pipeline_mode = #tpu.pipeline_mode<synchronous>, transform_indices = @transform_6, window_bounds = array<i64: 4, 1>}, {pipeline_mode = #tpu.pipeline_mode<synchronous>, transform_indices = @transform_7, window_bounds = array<i64: 32, 4>}, {pipeline_mode = #tpu.pipeline_mode<synchronous>, transform_indices = @transform_8, window_bounds = array<i64: 32, 1>}, {transform_indices = @transform_9, window_bounds = array<i64: 1, 32, 256>}]} {
    %c256_i32 = arith.constant 256 : i32
    %0 = arith.muli %arg1, %c256_i32 : i32
    %1 = tpu.assume_multiple %0, 256 : i32
    %c0 = arith.constant 0 : index
    %c0_0 = arith.constant 0 : index
    %c0_1 = arith.constant 0 : index
    %2 = vector.load %arg2[%c0, %c0_0, %c0_1] : memref<1x32x256xf32, #tpu.memory_space<vmem>>, vector<1x32x256xf32>
    %3 = vector.shape_cast %2 : vector<1x32x256xf32> to vector<32x256xf32>
    %c0_2 = arith.constant 0 : index
    %c0_3 = arith.constant 0 : index
    %4 = arith.index_cast %1 : i32 to index
    %5 = vector.load %arg2[%c0_2, %c0_3, %4] : memref<1x32x256xf32, #tpu.memory_space<vmem>>, vector<1x32x256xf32>
    %6 = vector.shape_cast %5 : vector<1x32x256xf32> to vector<32x256xf32>
    %7 = tpu.transpose %3, [1, 0] : vector<32x256xf32> -> vector<256x32xf32>
    %c0_4 = arith.constant 0 : index
    %c0_5 = arith.constant 0 : index
    %8 = vector.load %arg3[%c0_4, %c0_5] : memref<32x4xf32, #tpu.memory_space<vmem>>, vector<32x4xf32>
    %cst = arith.constant dense<0.000000e+00> : vector<256x4xf32>
    %9 = tpu.matmul %7, %8, %cst {dimension_numbers = #tpu.dot_dimension_numbers<[1], [0], [0], [1], [0, 0, 1, 1], [], []>} : vector<256x32xf32>, vector<32x4xf32>, vector<256x4xf32> -> vector<256x4xf32>
    %c0_6 = arith.constant 0 : index
    %c0_7 = arith.constant 0 : index
    %10 = vector.load %arg4[%c0_6, %c0_7] : memref<1x4xf32, #tpu.memory_space<vmem>>, vector<1x4xf32>
    %11 = vector.broadcast %10 : vector<1x4xf32> to vector<256x4xf32>
    %12 = arith.addf %9, %11 : vector<256x4xf32>
    %c0_8 = arith.constant 0 : index
    %c0_9 = arith.constant 0 : index
    %13 = vector.load %arg5[%c0_8, %c0_9] : memref<4x32xf32, #tpu.memory_space<vmem>>, vector<4x32xf32>
    %cst_10 = arith.constant dense<0.000000e+00> : vector<4x256xf32>
    %14 = tpu.matmul %13, %6, %cst_10 {dimension_numbers = #tpu.dot_dimension_numbers<[1], [0], [0], [1], [0, 0, 1, 1], [], []>} : vector<4x32xf32>, vector<32x256xf32>, vector<4x256xf32> -> vector<4x256xf32>
    %c0_11 = arith.constant 0 : index
    %c0_12 = arith.constant 0 : index
    %15 = vector.load %arg6[%c0_11, %c0_12] : memref<4x1xf32, #tpu.memory_space<vmem>>, vector<4x1xf32>
    %16 = vector.broadcast %15 : vector<4x1xf32> to vector<4x256xf32>
    %17 = arith.addf %14, %16 : vector<4x256xf32>
    %c0_13 = arith.constant 0 : index
    %c0_14 = arith.constant 0 : index
    %18 = vector.load %arg7[%c0_13, %c0_14] : memref<4x32xf32, #tpu.memory_space<vmem>>, vector<4x32xf32>
    %cst_15 = arith.constant dense<0.000000e+00> : vector<4x256xf32>
    %19 = tpu.matmul %18, %3, %cst_15 {dimension_numbers = #tpu.dot_dimension_numbers<[1], [0], [0], [1], [0, 0, 1, 1], [], []>} : vector<4x32xf32>, vector<32x256xf32>, vector<4x256xf32> -> vector<4x256xf32>
    %c0_16 = arith.constant 0 : index
    %c0_17 = arith.constant 0 : index
    %20 = vector.load %arg8[%c0_16, %c0_17] : memref<4x1xf32, #tpu.memory_space<vmem>>, vector<4x1xf32>
    %21 = vector.broadcast %20 : vector<4x1xf32> to vector<4x256xf32>
    %22 = arith.addf %19, %21 : vector<4x256xf32>
    %cst_18 = arith.constant dense<0.000000e+00> : vector<256x256xf32>
    %23 = tpu.matmul %12, %17, %cst_18 {dimension_numbers = #tpu.dot_dimension_numbers<[1], [0], [0], [1], [0, 0, 1, 1], [], []>} : vector<256x4xf32>, vector<4x256xf32>, vector<256x256xf32> -> vector<256x256xf32>
    %cst_19 = arith.constant dense<0xFF800000> : vector<256xf32>
    %24 = vector.multi_reduction <maximumf>, %23, %cst_19 [0] : vector<256x256xf32> to vector<256xf32>
    %25 = vector.shape_cast %24 : vector<256xf32> to vector<1x256xf32>
    %26 = vector.broadcast %25 : vector<1x256xf32> to vector<256x256xf32>
    %27 = arith.subf %23, %26 : vector<256x256xf32>
    %28 = math.exp %27 : vector<256x256xf32>
    %cst_20 = arith.constant dense<0.000000e+00> : vector<256xf32>
    %29 = vector.multi_reduction <add>, %28, %cst_20 [0] : vector<256x256xf32> to vector<256xf32>
    %30 = vector.shape_cast %29 : vector<256xf32> to vector<1x256xf32>
    %cst_21 = arith.constant 1.000000e+00 : f32
    %31 = vector.broadcast %cst_21 : f32 to vector<1x256xf32>
    %32 = arith.divf %31, %30 : vector<1x256xf32>
    %33 = vector.broadcast %32 : vector<1x256xf32> to vector<256x256xf32>
    %34 = arith.mulf %28, %33 : vector<256x256xf32>
    %cst_22 = arith.constant dense<0.000000e+00> : vector<4x256xf32>
    %35 = tpu.matmul %22, %34, %cst_22 {dimension_numbers = #tpu.dot_dimension_numbers<[1], [0], [0], [1], [0, 0, 1, 1], [], []>} : vector<4x256xf32>, vector<256x256xf32>, vector<4x256xf32> -> vector<4x256xf32>
    %c0_23 = arith.constant 0 : index
    %c0_24 = arith.constant 0 : index
    %36 = vector.load %arg9[%c0_23, %c0_24] : memref<32x4xf32, #tpu.memory_space<vmem>>, vector<32x4xf32>
    %cst_25 = arith.constant dense<0.000000e+00> : vector<32x256xf32>
    %37 = tpu.matmul %36, %35, %cst_25 {dimension_numbers = #tpu.dot_dimension_numbers<[1], [0], [0], [1], [0, 0, 1, 1], [], []>} : vector<32x4xf32>, vector<4x256xf32>, vector<32x256xf32> -> vector<32x256xf32>
    %c0_26 = arith.constant 0 : index
    %c0_27 = arith.constant 0 : index
    %38 = vector.load %arg10[%c0_26, %c0_27] : memref<32x1xf32, #tpu.memory_space<vmem>>, vector<32x1xf32>
    %39 = vector.broadcast %38 : vector<32x1xf32> to vector<32x256xf32>
    %40 = arith.addf %37, %39 : vector<32x256xf32>
    %41 = arith.addf %40, %6 : vector<32x256xf32>
    %c0_28 = arith.constant 0 : index
    %c0_29 = arith.constant 0 : index
    %c0_30 = arith.constant 0 : index
    %42 = vector.load %arg11[%c0_28, %c0_29, %c0_30] : memref<1x32x256xf32, #tpu.memory_space<vmem>>, vector<1x32x256xf32>
    %43 = vector.shape_cast %42 : vector<1x32x256xf32> to vector<32x256xf32>
    %44 = vector.shape_cast %41 : vector<32x256xf32> to vector<1x32x256xf32>
    tpu.vector_store %arg11[%c0_28, %c0_29, %c0_30], %44 {strides = array<i32>} : memref<1x32x256xf32, #tpu.memory_space<vmem>>, vector<1x32x256xf32>,
    return
  }
  func.func @transform_0(%arg0: i32, %arg1: i32) -> (i32, i32, i32) {
    %c0_i32 = arith.constant 0 : i32
    %c0_i32_0 = arith.constant 0 : i32
    %c0_i32_1 = arith.constant 0 : i32
    return %arg0, %c0_i32, %c0_i32_0 : i32, i32, i32
  }
  func.func @transform_1(%arg0: i32, %arg1: i32) -> (i32, i32) {
    %c0_i32 = arith.constant 0 : i32
    %c0_i32_0 = arith.constant 0 : i32
    %c0_i32_1 = arith.constant 0 : i32
    return %c0_i32, %c0_i32_0 : i32, i32
  }
  func.func @transform_2(%arg0: i32, %arg1: i32) -> (i32, i32) {
    %c0_i32 = arith.constant 0 : i32
    %c0_i32_0 = arith.constant 0 : i32
    %c0_i32_1 = arith.constant 0 : i32
    return %c0_i32, %c0_i32_0 : i32, i32
  }
  func.func @transform_3(%arg0: i32, %arg1: i32) -> (i32, i32) {
    %c0_i32 = arith.constant 0 : i32
    %c0_i32_0 = arith.constant 0 : i32
    %c0_i32_1 = arith.constant 0 : i32
    return %c0_i32, %c0_i32_0 : i32, i32
  }
  func.func @transform_4(%arg0: i32, %arg1: i32) -> (i32, i32) {
    %c0_i32 = arith.constant 0 : i32
    %c0_i32_0 = arith.constant 0 : i32
    %c0_i32_1 = arith.constant 0 : i32
    return %c0_i32, %c0_i32_0 : i32, i32
  }
  func.func @transform_5(%arg0: i32, %arg1: i32) -> (i32, i32) {
    %c0_i32 = arith.constant 0 : i32
    %c0_i32_0 = arith.constant 0 : i32
    %c0_i32_1 = arith.constant 0 : i32
    return %c0_i32, %c0_i32_0 : i32, i32
  }
  func.func @transform_6(%arg0: i32, %arg1: i32) -> (i32, i32) {
    %c0_i32 = arith.constant 0 : i32
    %c0_i32_0 = arith.constant 0 : i32
    %c0_i32_1 = arith.constant 0 : i32
    return %c0_i32, %c0_i32_0 : i32, i32
  }
  func.func @transform_7(%arg0: i32, %arg1: i32) -> (i32, i32) {
    %c0_i32 = arith.constant 0 : i32
    %c0_i32_0 = arith.constant 0 : i32
    %c0_i32_1 = arith.constant 0 : i32
    return %c0_i32, %c0_i32_0 : i32, i32
  }
  func.func @transform_8(%arg0: i32, %arg1: i32) -> (i32, i32) {
    %c0_i32 = arith.constant 0 : i32
    %c0_i32_0 = arith.constant 0 : i32
    %c0_i32_1 = arith.constant 0 : i32
    return %c0_i32, %c0_i32_0 : i32, i32
  }
  func.func @transform_9(%arg0: i32, %arg1: i32) -> (i32, i32, i32) {
    %c0_i32 = arith.constant 0 : i32
    %c0_i32_0 = arith.constant 0 : i32
    return %arg0, %c0_i32, %arg1 : i32, i32, i32
  }
}

</mosaic_0001>

<llo_original>
// kernel: tpu_custom_call.1
$region0: #{tpu_custom_call.1}
  #allocation0 [shape = 'u32[]', space=smem, size = 0x4, offset = 0x4, fixed_abs, tag = 'smem constant byte address 0x4 - core index']
  #allocation1 [shape = 'u32[72,128]{1,0:T(1,128)}', space=vmem, size = 0x9000, scoped, tag = 'internal scratch']
  %s0 = inlined_call_operand.hbm [shape: f32[2,32,256], index: 0, kind: input, shape index: {}]
  %s1 = inlined_call_operand.vmem [shape: f32[32,4], index: 1, kind: input, shape index: {}]
  %s2 = inlined_call_operand.vmem [shape: f32[1,4], index: 2, kind: input, shape index: {}]
  %s3 = inlined_call_operand.vmem [shape: f32[4,32], index: 3, kind: input, shape index: {}]
  %s4 = inlined_call_operand.vmem [shape: f32[4,1], index: 4, kind: input, shape index: {}]
  %s5 = inlined_call_operand.vmem [shape: f32[4,32], index: 5, kind: input, shape index: {}]
  %s6 = inlined_call_operand.vmem [shape: f32[4,1], index: 6, kind: input, shape index: {}]
  %s7 = inlined_call_operand.vmem [shape: f32[32,4], index: 7, kind: input, shape index: {}]
  %s8 = inlined_call_operand.vmem [shape: f32[32,1], index: 8, kind: input, shape index: {}]
  %s9 = inlined_call_operand.hbm [shape: f32[2,32,256], index: 9, kind: output, shape index: {}]
  %s10 = sld [smem:[#allocation0]]
  $region73: #{tpu_custom_call.1} parent=0
    _
  %s12 = ssub.s32 1, %s10
  %s13 = scalar_select 0, %s12, %s10
  $region1: #{tpu_custom_call.1} parent=0
    #allocation2 [shape = 'u8[65536]{0}', space=vmem, size = 0x10000, scoped, tag = 'input window, operand 0']
    #allocation3 [shape = 's32[2]{0}', space=sflag, size = 0x8, scoped, tag = 'scoped memory for tpu_custom_call.1']
    #allocation4 [shape = 's32[2]{0}', space=sflag, size = 0x8, scoped, tag = 'scoped memory for tpu_custom_call.1']
    #allocation5 [shape = 'u8[65536]{0}', space=vmem, size = 0x10000, scoped, tag = 'output window, operand 0']
    %14 = vsyncpa [#allocation3], 0
    %s15 = scalar_lea.sflag [#allocation3], 1
    %16 = vsyncpa %s15, 0
    %17 = vsyncpa [#allocation4], 0
    %s18 = scalar_lea.sflag [#allocation4], 1
    %19 = vsyncpa %s18, 0
    loop: start=0, step=1, limit=4
    $region2: #{tpu_custom_call.1} parent=1 // loop_pre_header
      _
    $region3: #{tpu_custom_call.1} parent=1 // loop_header
      %s21 = sphi 0, %s25
      %p22 = scmp.ge.s32.totalorder %s21, 4
      %s28 = sphi 0, %s40
      %s29 = sphi 0, %s36
      %s30 = sphi 0, %s28
      %s31 = sphi 0, %s29
      %s32 = sphi 0, %s30
      %s33 = sphi 0, %s31
      %s43 = sphi 0, %s45
      %s46 = sphi 0, %s43
      %s47 = sphi 0, %s46
      %s63 = sphi 0, %s47
      %s67 = sphi 0, %s67
      %s69 = sphi 0, %s67
      %s70 = sphi 0, %s69
      %s84 = sphi 0, %s70
      %s88 = sphi 0, %s88
      %s90 = sphi 0, %s88
      %s91 = sphi 0, %s90
      %s105 = sphi 0, %s91
      %s109 = sphi 0, %s109
      %s111 = sphi 0, %s109
      %s112 = sphi 0, %s111
      %s126 = sphi 0, %s112
      %s130 = sphi 0, %s130
      %s132 = sphi 0, %s130
      %s133 = sphi 0, %s132
      %s147 = sphi 0, %s133
      %s151 = sphi 0, %s151
      %s153 = sphi 0, %s151
      %s154 = sphi 0, %s153
      %s168 = sphi 0, %s154
      %s172 = sphi 0, %s172
      %s174 = sphi 0, %s172
      %s175 = sphi 0, %s174
      %s189 = sphi 0, %s175
      %s193 = sphi 0, %s193
      %s195 = sphi 0, %s193
      %s196 = sphi 0, %s195
      %s210 = sphi 0, %s196
      %s214 = sphi 0, %s214
      %s216 = sphi 0, %s214
      %s217 = sphi 0, %s216
      %s231 = sphi 0, %s217
      %s239 = sphi 0, %s241
      %s242 = sphi 0, %s239
      %s243 = sphi 0, %s242
      %s259 = sphi 0, %s243
    $region4: #{tpu_custom_call.1} parent=1 // loop_header_branch
      %24 = sbr.rel (%p22) target = $region8
    $region5: #{tpu_custom_call.1} parent=1 // loop_body
      %s26 = ssub.s32 %s21, 1
      %s27 = ssub.s32 %s21, 2
      %s34 = sadd.s32 1, %s29
      %p35 = scmp.ge.s32.totalorder %s34, 1
      %s36 = scalar_select %p35, 0, %s34
      %s37 = sadd.s32 1, %s28
      %s38 = scalar_select %p35, %s37, %s28
      %p39 = scmp.ge.s32.totalorder %s38, 2
      %s40 = scalar_select %p39, 0, %s38
      %s41 = ssub.s32 %s28, %s40
      %p42 = scmp.eq.s32.totalorder %s41, 0
      %s44 = sadd.s32 %s43, 1
      %s45 = scalar_select %p42, %s43, %s44
      %p48 = pneg %p42
      %p49 = scmp.eq.s32.totalorder %s21, 1
      %p50 = por %p48, %p49
      %p51 = scmp.ne.s32.totalorder %s43, %s46
      %p52 = scmp.eq.s32.totalorder %s21, 0
      %p53 = por %p51, %p52
      %p54 = scmp.ne.s32.totalorder %s43, %s46
      %p55 = scmp.eq.s32.totalorder %s26, 1
      %p56 = por %p54, %p55
      %p57 = scmp.ne.s32.totalorder %s46, %s47
      %p58 = scmp.eq.s32.totalorder %s26, 0
      %p59 = por %p57, %p58
      %p60 = scmp.ne.s32.totalorder %s46, %s47
      %p61 = scmp.eq.s32.totalorder %s27, 1
      %p62 = por %p60, %p61
      %p64 = scmp.ne.s32.totalorder %s47, %s63
      %p65 = scmp.eq.s32.totalorder %s27, 0
      %p66 = por %p64, %p65
      %s68 = sadd.s32 %s67, 1
      %p71 = scmp.eq.s32.totalorder %s21, 1
      %p72 = scmp.ne.s32.totalorder %s67, %s69
      %p73 = scmp.eq.s32.totalorder %s21, 0
      %p74 = por %p72, %p73
      %p75 = scmp.ne.s32.totalorder %s67, %s69
      %p76 = scmp.eq.s32.totalorder %s26, 1
      %p77 = por %p75, %p76
      %p78 = scmp.ne.s32.totalorder %s69, %s70
      %p79 = scmp.eq.s32.totalorder %s26, 0
      %p80 = por %p78, %p79
      %p81 = scmp.ne.s32.totalorder %s69, %s70
      %p82 = scmp.eq.s32.totalorder %s27, 1
      %p83 = por %p81, %p82
      %p85 = scmp.ne.s32.totalorder %s70, %s84
      %p86 = scmp.eq.s32.totalorder %s27, 0
      %p87 = por %p85, %p86
      %s89 = sadd.s32 %s88, 1
      %p92 = scmp.eq.s32.totalorder %s21, 1
      %p93 = scmp.ne.s32.totalorder %s88, %s90
      %p94 = scmp.eq.s32.totalorder %s21, 0
      %p95 = por %p93, %p94
      %p96 = scmp.ne.s32.totalorder %s88, %s90
      %p97 = scmp.eq.s32.totalorder %s26, 1
      %p98 = por %p96, %p97
      %p99 = scmp.ne.s32.totalorder %s90, %s91
      %p100 = scmp.eq.s32.totalorder %s26, 0
      %p101 = por %p99, %p100
      %p102 = scmp.ne.s32.totalorder %s90, %s91
      %p103 = scmp.eq.s32.totalorder %s27, 1
      %p104 = por %p102, %p103
      %p106 = scmp.ne.s32.totalorder %s91, %s105
      %p107 = scmp.eq.s32.totalorder %s27, 0
      %p108 = por %p106, %p107
      %s110 = sadd.s32 %s109, 1
      %p113 = scmp.eq.s32.totalorder %s21, 1
      %p114 = scmp.ne.s32.totalorder %s109, %s111
      %p115 = scmp.eq.s32.totalorder %s21, 0
      %p116 = por %p114, %p115
      %p117 = scmp.ne.s32.totalorder %s109, %s111
      %p118 = scmp.eq.s32.totalorder %s26, 1
      %p119 = por %p117, %p118
      %p120 = scmp.ne.s32.totalorder %s111, %s112
      %p121 = scmp.eq.s32.totalorder %s26, 0
      %p122 = por %p120, %p121
      %p123 = scmp.ne.s32.totalorder %s111, %s112
      %p124 = scmp.eq.s32.totalorder %s27, 1
      %p125 = por %p123, %p124
      %p127 = scmp.ne.s32.totalorder %s112, %s126
      %p128 = scmp.eq.s32.totalorder %s27, 0
      %p129 = por %p127, %p128
      %s131 = sadd.s32 %s130, 1
      %p134 = scmp.eq.s32.totalorder %s21, 1
      %p135 = scmp.ne.s32.totalorder %s130, %s132
      %p136 = scmp.eq.s32.totalorder %s21, 0
      %p137 = por %p135, %p136
      %p138 = scmp.ne.s32.totalorder %s130, %s132
      %p139 = scmp.eq.s32.totalorder %s26, 1
      %p140 = por %p138, %p139
      %p141 = scmp.ne.s32.totalorder %s132, %s133
      %p142 = scmp.eq.s32.totalorder %s26, 0
      %p143 = por %p141, %p142
      %p144 = scmp.ne.s32.totalorder %s132, %s133
      %p145 = scmp.eq.s32.totalorder %s27, 1
      %p146 = por %p144, %p145
      %p148 = scmp.ne.s32.totalorder %s133, %s147
      %p149 = scmp.eq.s32.totalorder %s27, 0
      %p150 = por %p148, %p149
      %s152 = sadd.s32 %s151, 1
      %p155 = scmp.eq.s32.totalorder %s21, 1
      %p156 = scmp.ne.s32.totalorder %s151, %s153
      %p157 = scmp.eq.s32.totalorder %s21, 0
      %p158 = por %p156, %p157
      %p159 = scmp.ne.s32.totalorder %s151, %s153
      %p160 = scmp.eq.s32.totalorder %s26, 1
      %p161 = por %p159, %p160
      %p162 = scmp.ne.s32.totalorder %s153, %s154
      %p163 = scmp.eq.s32.totalorder %s26, 0
      %p164 = por %p162, %p163
      %p165 = scmp.ne.s32.totalorder %s153, %s154
      %p166 = scmp.eq.s32.totalorder %s27, 1
      %p167 = por %p165, %p166
      %p169 = scmp.ne.s32.totalorder %s154, %s168
      %p170 = scmp.eq.s32.totalorder %s27, 0
      %p171 = por %p169, %p170
      %s173 = sadd.s32 %s172, 1
      %p176 = scmp.eq.s32.totalorder %s21, 1
      %p177 = scmp.ne.s32.totalorder %s172, %s174
      %p178 = scmp.eq.s32.totalorder %s21, 0
      %p179 = por %p177, %p178
      %p180 = scmp.ne.s32.totalorder %s172, %s174
      %p181 = scmp.eq.s32.totalorder %s26, 1
      %p182 = por %p180, %p181
      %p183 = scmp.ne.s32.totalorder %s174, %s175
      %p184 = scmp.eq.s32.totalorder %s26, 0
      %p185 = por %p183, %p184
      %p186 = scmp.ne.s32.totalorder %s174, %s175
      %p187 = scmp.eq.s32.totalorder %s27, 1
      %p188 = por %p186, %p187
      %p190 = scmp.ne.s32.totalorder %s175, %s189
      %p191 = scmp.eq.s32.totalorder %s27, 0
      %p192 = por %p190, %p191
      %s194 = sadd.s32 %s193, 1
      %p197 = scmp.eq.s32.totalorder %s21, 1
      %p198 = scmp.ne.s32.totalorder %s193, %s195
      %p199 = scmp.eq.s32.totalorder %s21, 0
      %p200 = por %p198, %p199
      %p201 = scmp.ne.s32.totalorder %s193, %s195
      %p202 = scmp.eq.s32.totalorder %s26, 1
      %p203 = por %p201, %p202
      %p204 = scmp.ne.s32.totalorder %s195, %s196
      %p205 = scmp.eq.s32.totalorder %s26, 0
      %p206 = por %p204, %p205
      %p207 = scmp.ne.s32.totalorder %s195, %s196
      %p208 = scmp.eq.s32.totalorder %s27, 1
      %p209 = por %p207, %p208
      %p211 = scmp.ne.s32.totalorder %s196, %s210
      %p212 = scmp.eq.s32.totalorder %s27, 0
      %p213 = por %p211, %p212
      %s215 = sadd.s32 %s214, 1
      %p218 = scmp.eq.s32.totalorder %s21, 1
      %p219 = scmp.ne.s32.totalorder %s214, %s216
      %p220 = scmp.eq.s32.totalorder %s21, 0
      %p221 = por %p219, %p220
      %p222 = scmp.ne.s32.totalorder %s214, %s216
      %p223 = scmp.eq.s32.totalorder %s26, 1
      %p224 = por %p222, %p223
      %p225 = scmp.ne.s32.totalorder %s216, %s217
      %p226 = scmp.eq.s32.totalorder %s26, 0
      %p227 = por %p225, %p226
      %p228 = scmp.ne.s32.totalorder %s216, %s217
      %p229 = scmp.eq.s32.totalorder %s27, 1
      %p230 = por %p228, %p229
      %p232 = scmp.ne.s32.totalorder %s217, %s231
      %p233 = scmp.eq.s32.totalorder %s27, 0
      %p234 = por %p232, %p233
      %s235 = ssub.s32 %s28, %s40
      %s236 = ssub.s32 %s29, %s36
      %s237 = sor.u32 %s235, %s236
      %p238 = scmp.eq.s32.totalorder %s237, 0
      %s240 = sadd.s32 %s239, 1
      %s241 = scalar_select %p238, %s239, %s240
      %p244 = pneg %p238
      %p245 = scmp.eq.s32.totalorder %s21, 1
      %p246 = por %p244, %p245
      %p247 = scmp.ne.s32.totalorder %s239, %s242
      %p248 = scmp.eq.s32.totalorder %s21, 0
      %p249 = por %p247, %p248
      %p250 = scmp.ne.s32.totalorder %s239, %s242
      %p251 = scmp.eq.s32.totalorder %s26, 1
      %p252 = por %p250, %p251
      %p253 = scmp.ne.s32.totalorder %s242, %s243
      %p254 = scmp.eq.s32.totalorder %s26, 0
      %p255 = por %p253, %p254
      %p256 = scmp.ne.s32.totalorder %s242, %s243
      %p257 = scmp.eq.s32.totalorder %s27, 1
      %p258 = por %p256, %p257
      %p260 = scmp.ne.s32.totalorder %s243, %s259
      %p261 = scmp.eq.s32.totalorder %s27, 0
      %p262 = por %p260, %p261
      %p263 = scmp.le.s32.totalorder 1, %s21
      %p264 = scmp.lt.s32.totalorder %s21, 3
      %p265 = pnand %p263, %p264
      %p266 = pneg %p265
      // Predicated region
      $region9: #{tpu_custom_call.1} parent=5 // pred_check
        _
      $region10: #{tpu_custom_call.1} parent=5 // pred_check_branch
        %268 = sbr.rel (%p265) target = $region12
      $region11: #{tpu_custom_call.1} parent=5 // pred_region
        %s269 = ssub.s32 %s21, 1
        // Predicated region
        $region13: #{tpu_custom_call.1} parent=11 // pred_check
          %p270 = pneg %p80
        $region14: #{tpu_custom_call.1} parent=11 // pred_check_branch
          %272 = sbr.rel (%p270) target = $region16
        $region15: #{tpu_custom_call.1} parent=11 // pred_region
          _
        $region16: #{tpu_custom_call.1} parent=11 // pred_fallthru
          _
        // Predicated region
        $region17: #{tpu_custom_call.1} parent=11 // pred_check
          %p273 = pneg %p101
        $region18: #{tpu_custom_call.1} parent=11 // pred_check_branch
          %275 = sbr.rel (%p273) target = $region20
        $region19: #{tpu_custom_call.1} parent=11 // pred_region
          _
        $region20: #{tpu_custom_call.1} parent=11 // pred_fallthru
          _
        // Predicated region
        $region21: #{tpu_custom_call.1} parent=11 // pred_check
          %p276 = pneg %p122
        $region22: #{tpu_custom_call.1} parent=11 // pred_check_branch
          %278 = sbr.rel (%p276) target = $region24
        $region23: #{tpu_custom_call.1} parent=11 // pred_region
          _
        $region24: #{tpu_custom_call.1} parent=11 // pred_fallthru
          _
        // Predicated region
        $region25: #{tpu_custom_call.1} parent=11 // pred_check
          %p279 = pneg %p143
        $region26: #{tpu_custom_call.1} parent=11 // pred_check_branch
          %281 = sbr.rel (%p279) target = $region28
        $region27: #{tpu_custom_call.1} parent=11 // pred_region
          _
        $region28: #{tpu_custom_call.1} parent=11 // pred_fallthru
          _
        // Predicated region
        $region29: #{tpu_custom_call.1} parent=11 // pred_check
          %p282 = pneg %p164
        $region30: #{tpu_custom_call.1} parent=11 // pred_check_branch
          %284 = sbr.rel (%p282) target = $region32
        $region31: #{tpu_custom_call.1} parent=11 // pred_region
          _
        $region32: #{tpu_custom_call.1} parent=11 // pred_fallthru
          _
        // Predicated region
        $region33: #{tpu_custom_call.1} parent=11 // pred_check
          %p285 = pneg %p185
        $region34: #{tpu_custom_call.1} parent=11 // pred_check_branch
          %287 = sbr.rel (%p285) target = $region36
        $region35: #{tpu_custom_call.1} parent=11 // pred_region
          _
        $region36: #{tpu_custom_call.1} parent=11 // pred_fallthru
          _
        // Predicated region
        $region37: #{tpu_custom_call.1} parent=11 // pred_check
          %p288 = pneg %p206
        $region38: #{tpu_custom_call.1} parent=11 // pred_check_branch
          %290 = sbr.rel (%p288) target = $region40
        $region39: #{tpu_custom_call.1} parent=11 // pred_region
          _
        $region40: #{tpu_custom_call.1} parent=11 // pred_fallthru
          _
        // Predicated region
        $region41: #{tpu_custom_call.1} parent=11 // pred_check
          %p291 = pneg %p227
        $region42: #{tpu_custom_call.1} parent=11 // pred_check_branch
          %293 = sbr.rel (%p291) target = $region44
        $region43: #{tpu_custom_call.1} parent=11 // pred_region
          _
        $region44: #{tpu_custom_call.1} parent=11 // pred_fallthru
          _
      $region12: #{tpu_custom_call.1} parent=5 // pred_fallthru
        _
      %p294 = scmp.lt.s32.totalorder %s21, 2
      // Predicated region
      $region45: #{tpu_custom_call.1} parent=5 // pred_check
        %p295 = pneg %p294
      $region46: #{tpu_custom_call.1} parent=5 // pred_check_branch
        %297 = sbr.rel (%p295) target = $region48
      $region47: #{tpu_custom_call.1} parent=5 // pred_region
        // Predicated region
        $region49: #{tpu_custom_call.1} parent=47 // pred_check
          %p298 = pneg %p53
        $region50: #{tpu_custom_call.1} parent=47 // pred_check_branch
          %300 = sbr.rel (%p298) target = $region52
        $region51: #{tpu_custom_call.1} parent=47 // pred_region
          %s301 = sand.u32 %s43, 1
          %s302 = scalar_lea.sflag [#allocation3], %s301
          %s303 = sand.u32 %s43, 1
          %s304 = smul.addr %s303, 64
          %s305 = scalar_lea.vmem [#allocation2], %s304
          %307 = vsyncadd %s302, 0
          %s308 = smul.addr %s28, 8
          %s309 = smul.addr %s308, 8
          %s310 = scalar_lea.hbm %s0, %s309
          %s311 = sshll.u32 %s310, 4
          %s312 = int_to_ptr.hbm [resolvable:$true] %s311
          %s313 = sshll.u32 %s305, 4
          %s314 = int_to_ptr.vmem [resolvable:$true] %s313
          %319 = dma.hbm_to_vmem [thread:$0]  %s312, 1024, %s314, %s302, 256, 256, 16
        $region52: #{tpu_custom_call.1} parent=47 // pred_fallthru
          _
      $region48: #{tpu_custom_call.1} parent=5 // pred_fallthru
        _
      %p320 = scmp.le.s32.totalorder 1, %s21
      %p321 = scmp.lt.s32.totalorder %s21, 3
      %p322 = pnand %p320, %p321
      %p323 = pneg %p322
      // Predicated region
      $region53: #{tpu_custom_call.1} parent=5 // pred_check
        _
      $region54: #{tpu_custom_call.1} parent=5 // pred_check_branch
        %325 = sbr.rel (%p322) target = $region56
      $region55: #{tpu_custom_call.1} parent=5 // pred_region
        %s326 = ssub.s32 %s21, 1
        %s327 = sand.u32 %s46, 1
        %s328 = scalar_lea.sflag [#allocation3], %s327
        %s329 = sand.u32 %s46, 1
        %s330 = smul.addr %s329, 64
        %s331 = scalar_lea.vmem [#allocation2], %s330
        // Predicated region
        $region57: #{tpu_custom_call.1} parent=55 // pred_check
          %p332 = pneg %p59
        $region58: #{tpu_custom_call.1} parent=55 // pred_check_branch
          %334 = sbr.rel (%p332) target = $region60
        $region59: #{tpu_custom_call.1} parent=55 // pred_region
          %336 = dma.done %s328, 1024
        $region60: #{tpu_custom_call.1} parent=55 // pred_fallthru
          _
        %s337 = sand.u32 %s46, 1
        %s338 = scalar_lea.sflag [#allocation3], %s337
        %s339 = sand.u32 %s46, 1
        %s340 = smul.addr %s339, 64
        %s341 = scalar_lea.vmem [#allocation2], %s340
        %p342 = pneg %p59
        %p343 = pneg %p56
        %p344 = pneg %p80
        %p345 = pneg %p77
        %p346 = pneg %p101
        %p347 = pneg %p98
        %p348 = pneg %p122
        %p349 = pneg %p119
        %p350 = pneg %p143
        %p351 = pneg %p140
        %p352 = pneg %p164
        %p353 = pneg %p161
        %p354 = pneg %p185
        %p355 = pneg %p182
        %p356 = pneg %p206
        %p357 = pneg %p203
        %p358 = pneg %p227
        %p359 = pneg %p224
        %p360 = pneg %p255
        %p361 = pneg %p252
        %s362 = sand.u32 %s242, 1
        %s363 = scalar_lea.sflag [#allocation4], %s362
        %s364 = sand.u32 %s242, 1
        %s365 = smul.addr %s364, 64
        %s366 = scalar_lea.vmem [#allocation5], %s365
        %s367 = smul.u32 2, %s31
        %s368 = smul.u32 %s31, 256
        %v369 = vld [vmem:[%s331] sm:$0xff]
        %v370 = vld [vmem:[%s331 + $0x8] sm:$0xff]
        %v371 = vld [vmem:[%s331 + $0x10] sm:$0xff]
        %v372 = vld [vmem:[%s331 + $0x18] sm:$0xff]
        %v373 = vld [vmem:[%s331 + $0x20] sm:$0xff]
        %v374 = vld [vmem:[%s331 + $0x28] sm:$0xff]
        %v375 = vld [vmem:[%s331 + $0x30] sm:$0xff]
        %v376 = vld [vmem:[%s331 + $0x38] sm:$0xff]
        %s377 = sshra.s32 %s368, 7
        %s378 = sand.u32 %s368, 127
        %s379 = smul.addr %s377, 8
        %s380 = scalar_lea.vmem %s331, %s379 [#allocation2]
        %v381 = vld [vmem:[%s380] sm:$0xff]
        %v382 = vld [vmem:[%s380 + $0x8] sm:$0xff]
        %v383 = vld [vmem:[%s380 + $0x10] sm:$0xff]
        %v384 = vld [vmem:[%s380 + $0x18] sm:$0xff]
        %v385 = vld [vmem:[%s380 + $0x20] sm:$0xff]
        %v386 = vld [vmem:[%s380 + $0x28] sm:$0xff]
        %v387 = vld [vmem:[%s380 + $0x30] sm:$0xff]
        %v388 = vld [vmem:[%s380 + $0x38] sm:$0xff]
        %389 = vxpose.xlu0.b32.start [1/16] %v369, 128
        %390 = vxpose.xlu0.b32.cont [2/16] %v371, 128
        %391 = vxpose.xlu0.b32.cont [3/16] %v373, 128
        %392 = vxpose.xlu0.b32.cont [4/16] %v375, 128
        %393 = vxpose.xlu0.b32.cont [5/16] 0.0, 128
        %394 = vxpose.xlu0.b32.cont [6/16] 0.0, 128
        %395 = vxpose.xlu0.b32.cont [7/16] 0.0, 128
        %396 = vxpose.xlu0.b32.cont [8/16] 0.0, 128
        %397 = vxpose.xlu0.b32.cont [9/16] 0.0, 128
        %398 = vxpose.xlu0.b32.cont [10/16] 0.0, 128
        %399 = vxpose.xlu0.b32.cont [11/16] 0.0, 128
        %400 = vxpose.xlu0.b32.cont [12/16] 0.0, 128
        %401 = vxpose.xlu0.b32.cont [13/16] 0.0, 128
        %402 = vxpose.xlu0.b32.cont [14/16] 0.0, 128
        %403 = vxpose.xlu0.b32.cont [15/16] 0.0, 128
        %404 = vxpose.xlu0.b32.end [16/16] 0.0, 128
        %v405 = vpop.trf.xlu0
        %v406 = vpop.trf.xlu0
        %v407 = vpop.trf.xlu0
        %v408 = vpop.trf.xlu0
        %v409 = vpop.trf.xlu0
        %v410 = vpop.trf.xlu0
        %v411 = vpop.trf.xlu0
        %v412 = vpop.trf.xlu0
        %v413 = vpop.trf.xlu0
        %v414 = vpop.trf.xlu0
        %v415 = vpop.trf.xlu0
        %v416 = vpop.trf.xlu0
        %v417 = vpop.trf.xlu0
        %v418 = vpop.trf.xlu0
        %v419 = vpop.trf.xlu0
        %v420 = vpop.trf.xlu0
        %421 = vxpose.xlu0.b32.start [1/16] %v370, 128
        %422 = vxpose.xlu0.b32.cont [2/16] %v372, 128
        %423 = vxpose.xlu0.b32.cont [3/16] %v374, 128
        %424 = vxpose.xlu0.b32.cont [4/16] %v376, 128
        %425 = vxpose.xlu0.b32.cont [5/16] 0.0, 128
        %426 = vxpose.xlu0.b32.cont [6/16] 0.0, 128
        %427 = vxpose.xlu0.b32.cont [7/16] 0.0, 128
        %428 = vxpose.xlu0.b32.cont [8/16] 0.0, 128
        %429 = vxpose.xlu0.b32.cont [9/16] 0.0, 128
        %430 = vxpose.xlu0.b32.cont [10/16] 0.0, 128
        %431 = vxpose.xlu0.b32.cont [11/16] 0.0, 128
        %432 = vxpose.xlu0.b32.cont [12/16] 0.0, 128
        %433 = vxpose.xlu0.b32.cont [13/16] 0.0, 128
        %434 = vxpose.xlu0.b32.cont [14/16] 0.0, 128
        %435 = vxpose.xlu0.b32.cont [15/16] 0.0, 128
        %436 = vxpose.xlu0.b32.end [16/16] 0.0, 128
        %v437 = vpop.trf.xlu0
        %v438 = vpop.trf.xlu0
        %v439 = vpop.trf.xlu0
        %v440 = vpop.trf.xlu0
        %v441 = vpop.trf.xlu0
        %v442 = vpop.trf.xlu0
        %v443 = vpop.trf.xlu0
        %v444 = vpop.trf.xlu0
        %v445 = vpop.trf.xlu0
        %v446 = vpop.trf.xlu0
        %v447 = vpop.trf.xlu0
        %v448 = vpop.trf.xlu0
        %v449 = vpop.trf.xlu0
        %v450 = vpop.trf.xlu0
        %v451 = vpop.trf.xlu0
        %v452 = vpop.trf.xlu0
        %v453 = vld [vmem:[%s1] sm:$0xff]
        %v454 = vld [vmem:[%s1 + $0x8] sm:$0xff]
        %v455 = vld [vmem:[%s1 + $0x10] sm:$0xff]
        %v456 = vld [vmem:[%s1 + $0x18] sm:$0xff]
        %v457 = vld [vmem:[%s2] sm:$0x1]
        %v459 = vperm.slane %v457, 0
        %vm461 = vcmask 261120
        %v463 = vsel %vm461, %v405, 0
        %v466 = vsel %vm461, %v406, 0
        %v469 = vsel %vm461, %v407, 0
        %v472 = vsel %vm461, %v408, 0
        %v475 = vsel %vm461, %v409, 0
        %v478 = vsel %vm461, %v410, 0
        %v481 = vsel %vm461, %v411, 0
        %v484 = vsel %vm461, %v412, 0
        %v487 = vsel %vm461, %v413, 0
        %v490 = vsel %vm461, %v414, 0
        %v493 = vsel %vm461, %v415, 0
        %v496 = vsel %vm461, %v416, 0
        %v499 = vsel %vm461, %v417, 0
        %v502 = vsel %vm461, %v418, 0
        %v505 = vsel %vm461, %v419, 0
        %v508 = vsel %vm461, %v420, 0
        %v511 = vsel %vm461, %v437, 0
        %v514 = vsel %vm461, %v438, 0
        %v517 = vsel %vm461, %v439, 0
        %v520 = vsel %vm461, %v440, 0
        %v523 = vsel %vm461, %v441, 0
        %v526 = vsel %vm461, %v442, 0
        %v529 = vsel %vm461, %v443, 0
        %v532 = vsel %vm461, %v444, 0
        %v535 = vsel %vm461, %v445, 0
        %v538 = vsel %vm461, %v446, 0
        %v541 = vsel %vm461, %v447, 0
        %v544 = vsel %vm461, %v448, 0
        %v547 = vsel %vm461, %v449, 0
        %v550 = vsel %vm461, %v450, 0
        %v553 = vsel %vm461, %v451, 0
        %v556 = vsel %vm461, %v452, 0
        %558 = vmatpush.msra.mxu0 0.0
        %559 = vmatpush.msra.mxu0 0.0
        %560 = vmatpush.msra.mxu0 0.0
        %561 = vmatpush.msra.mxu0 0.0
        %562 = vmatpush.msra.mxu0 0.0
        %563 = vmatpush.msra.mxu0 0.0
        %564 = vmatpush.msra.mxu0 0.0
        %565 = vmatpush.msra.mxu0 0.0
        %566 = vmatpush.msra.mxu0 0.0
        %567 = vmatpush.msra.mxu0 0.0
        %568 = vmatpush.msra.mxu0 0.0
        %569 = vmatpush.msra.mxu0 0.0
        %570 = vmatpush.msra.mxu0 %v456
        %571 = vmatpush.msra.mxu0 %v455
        %572 = vmatpush.msra.mxu0 %v454
        %573 = vmatpush.msra.mxu0 %v453
        %574 = vmatmul.f32.gmra.mxu0 %v463
        %v575 = vpop.f32.mrf.mxu0
        %v576 = vadd.f32 %v459, %v575
        %577 = vmatmul.f32.gmra.mxu0 %v466
        %v578 = vpop.f32.mrf.mxu0
        %v579 = vadd.f32 %v459, %v578
        %580 = vmatmul.f32.gmra.mxu0 %v469
        %v581 = vpop.f32.mrf.mxu0
        %v582 = vadd.f32 %v459, %v581
        %583 = vmatmul.f32.gmra.mxu0 %v472
        %v584 = vpop.f32.mrf.mxu0
        %v585 = vadd.f32 %v459, %v584
        %586 = vmatmul.f32.gmra.mxu0 %v475
        %v587 = vpop.f32.mrf.mxu0
        %v588 = vadd.f32 %v459, %v587
        %589 = vmatmul.f32.gmra.mxu0 %v478
        %v590 = vpop.f32.mrf.mxu0
        %v591 = vadd.f32 %v459, %v590
        %592 = vmatmul.f32.gmra.mxu0 %v481
        %v593 = vpop.f32.mrf.mxu0
        %v594 = vadd.f32 %v459, %v593
        %595 = vmatmul.f32.gmra.mxu0 %v484
        %v596 = vpop.f32.mrf.mxu0
        %v597 = vadd.f32 %v459, %v596
        %598 = vmatmul.f32.gmra.mxu0 %v487
        %v599 = vpop.f32.mrf.mxu0
        %v600 = vadd.f32 %v459, %v599
        %601 = vmatmul.f32.gmra.mxu0 %v490
        %v602 = vpop.f32.mrf.mxu0
        %v603 = vadd.f32 %v459, %v602
        %604 = vmatmul.f32.gmra.mxu0 %v493
        %v605 = vpop.f32.mrf.mxu0
        %v606 = vadd.f32 %v459, %v605
        %607 = vmatmul.f32.gmra.mxu0 %v496
        %v608 = vpop.f32.mrf.mxu0
        %v609 = vadd.f32 %v459, %v608
        %610 = vmatmul.f32.gmra.mxu0 %v499
        %v611 = vpop.f32.mrf.mxu0
        %v612 = vadd.f32 %v459, %v611
        %613 = vmatmul.f32.gmra.mxu0 %v502
        %v614 = vpop.f32.mrf.mxu0
        %v615 = vadd.f32 %v459, %v614
        %616 = vmatmul.f32.gmra.mxu0 %v505
        %v617 = vpop.f32.mrf.mxu0
        %v618 = vadd.f32 %v459, %v617
        %619 = vmatmul.f32.gmra.mxu0 %v508
        %v620 = vpop.f32.mrf.mxu0
        %v621 = vadd.f32 %v459, %v620
        %622 = vmatmul.f32.gmra.mxu0 %v511
        %v623 = vpop.f32.mrf.mxu0
        %v624 = vadd.f32 %v459, %v623
        %625 = vmatmul.f32.gmra.mxu0 %v514
        %v626 = vpop.f32.mrf.mxu0
        %v627 = vadd.f32 %v459, %v626
        %628 = vmatmul.f32.gmra.mxu0 %v517
        %v629 = vpop.f32.mrf.mxu0
        %v630 = vadd.f32 %v459, %v629
        %631 = vmatmul.f32.gmra.mxu0 %v520
        %v632 = vpop.f32.mrf.mxu0
        %v633 = vadd.f32 %v459, %v632
        %634 = vmatmul.f32.gmra.mxu0 %v523
        %v635 = vpop.f32.mrf.mxu0
        %v636 = vadd.f32 %v459, %v635
        %637 = vmatmul.f32.gmra.mxu0 %v526
        %v638 = vpop.f32.mrf.mxu0
        %v639 = vadd.f32 %v459, %v638
        %640 = vmatmul.f32.gmra.mxu0 %v529
        %v641 = vpop.f32.mrf.mxu0
        %v642 = vadd.f32 %v459, %v641
        %643 = vmatmul.f32.gmra.mxu0 %v532
        %v644 = vpop.f32.mrf.mxu0
        %v645 = vadd.f32 %v459, %v644
        %646 = vmatmul.f32.gmra.mxu0 %v535
        %v647 = vpop.f32.mrf.mxu0
        %v648 = vadd.f32 %v459, %v647
        %649 = vmatmul.f32.gmra.mxu0 %v538
        %v650 = vpop.f32.mrf.mxu0
        %v651 = vadd.f32 %v459, %v650
        %652 = vmatmul.f32.gmra.mxu0 %v541
        %v653 = vpop.f32.mrf.mxu0
        %v654 = vadd.f32 %v459, %v653
        %655 = vmatmul.f32.gmra.mxu0 %v544
        %v656 = vpop.f32.mrf.mxu0
        %v657 = vadd.f32 %v459, %v656
        %658 = vmatmul.f32.gmra.mxu0 %v547
        %v659 = vpop.f32.mrf.mxu0
        %v660 = vadd.f32 %v459, %v659
        %661 = vmatmul.f32.gmra.mxu0 %v550
        %v662 = vpop.f32.mrf.mxu0
        %v663 = vadd.f32 %v459, %v662
        %664 = vmatmul.f32.gmra.mxu0 %v553
        %v665 = vpop.f32.mrf.mxu0
        %v666 = vadd.f32 %v459, %v665
        %667 = vmatmul.f32.gmra.mxu0 %v556
        %v668 = vpop.f32.mrf.mxu0
        %v669 = vadd.f32 %v459, %v668
        %670 = vdwg.mxu0
        %v671 = vld [vmem:[%s3] sm:$0xf]
        %v672 = vld [vmem:[%s4] sm:$0xf]
        %674 = vset.pattern.permute.xlu0 0
        %675 = vperm.xlu0 %674, %v672
        %v676 = vpop.permute.xlu0 %675
        %v679 = vsel %vm461, %v671, 0
        %681 = vmatpush.msra.mxu0 0.0
        %682 = vmatpush.msra.mxu0 0.0
        %683 = vmatpush.msra.mxu0 0.0
        %684 = vmatpush.msra.mxu0 0.0
        %685 = vmatpush.msra.mxu0 0.0
        %686 = vmatpush.msra.mxu0 0.0
        %687 = vmatpush.msra.mxu0 0.0
        %688 = vmatpush.msra.mxu0 0.0
        %689 = vmatpush.msra.mxu0 0.0
        %690 = vmatpush.msra.mxu0 0.0
        %691 = vmatpush.msra.mxu0 0.0
        %692 = vmatpush.msra.mxu0 0.0
        %693 = vmatpush.msra.mxu0 %v387
        %694 = vmatpush.msra.mxu0 %v385
        %695 = vmatpush.msra.mxu0 %v383
        %696 = vmatpush.msra.mxu0 %v381
        %697 = vmatmul.f32.gmra.mxu0 %v679
        %v698 = vpop.f32.mrf.mxu0
        %v699 = vadd.f32 %v676, %v698
        %700 = vdwg.mxu0
        %701 = vmatpush.msra.mxu0 0.0
        %702 = vmatpush.msra.mxu0 0.0
        %703 = vmatpush.msra.mxu0 0.0
        %704 = vmatpush.msra.mxu0 0.0
        %705 = vmatpush.msra.mxu0 0.0
        %706 = vmatpush.msra.mxu0 0.0
        %707 = vmatpush.msra.mxu0 0.0
        %708 = vmatpush.msra.mxu0 0.0
        %709 = vmatpush.msra.mxu0 0.0
        %710 = vmatpush.msra.mxu0 0.0
        %711 = vmatpush.msra.mxu0 0.0
        %712 = vmatpush.msra.mxu0 0.0
        %713 = vmatpush.msra.mxu0 %v388
        %714 = vmatpush.msra.mxu0 %v386
        %715 = vmatpush.msra.mxu0 %v384
        %716 = vmatpush.msra.mxu0 %v382
        %717 = vmatmul.f32.gmra.mxu0 %v679
        %v718 = vpop.f32.mrf.mxu0
        %v719 = vadd.f32 %v676, %v718
        %720 = vdwg.mxu0
        %v721 = vld [vmem:[%s5] sm:$0xf]
        %v722 = vld [vmem:[%s6] sm:$0xf]
        %724 = vset.pattern.permute.xlu0 0
        %725 = vperm.xlu0 %724, %v722
        %v726 = vpop.permute.xlu0 %725
        %v729 = vsel %vm461, %v721, 0
        %731 = vmatpush.msra.mxu0 0.0
        %732 = vmatpush.msra.mxu0 0.0
        %733 = vmatpush.msra.mxu0 0.0
        %734 = vmatpush.msra.mxu0 0.0
        %735 = vmatpush.msra.mxu0 0.0
        %736 = vmatpush.msra.mxu0 0.0
        %737 = vmatpush.msra.mxu0 0.0
        %738 = vmatpush.msra.mxu0 0.0
        %739 = vmatpush.msra.mxu0 0.0
        %740 = vmatpush.msra.mxu0 0.0
        %741 = vmatpush.msra.mxu0 0.0
        %742 = vmatpush.msra.mxu0 0.0
        %743 = vmatpush.msra.mxu0 %v375
        %744 = vmatpush.msra.mxu0 %v373
        %745 = vmatpush.msra.mxu0 %v371
        %746 = vmatpush.msra.mxu0 %v369
        %747 = vmatmul.f32.gmra.mxu0 %v729
        %v748 = vpop.f32.mrf.mxu0
        %v749 = vadd.f32 %v726, %v748
        %750 = vdwg.mxu0
        %751 = vmatpush.msra.mxu0 0.0
        %752 = vmatpush.msra.mxu0 0.0
        %753 = vmatpush.msra.mxu0 0.0
        %754 = vmatpush.msra.mxu0 0.0
        %755 = vmatpush.msra.mxu0 0.0
        %756 = vmatpush.msra.mxu0 0.0
        %757 = vmatpush.msra.mxu0 0.0
        %758 = vmatpush.msra.mxu0 0.0
        %759 = vmatpush.msra.mxu0 0.0
        %760 = vmatpush.msra.mxu0 0.0
        %761 = vmatpush.msra.mxu0 0.0
        %762 = vmatpush.msra.mxu0 0.0
        %763 = vmatpush.msra.mxu0 %v376
        %764 = vmatpush.msra.mxu0 %v374
        %765 = vmatpush.msra.mxu0 %v372
        %766 = vmatpush.msra.mxu0 %v370
        %767 = vmatmul.f32.gmra.mxu0 %v729
        %v768 = vpop.f32.mrf.mxu0
        %v769 = vadd.f32 %v726, %v768
        %770 = vdwg.mxu0
        %vm771 = vcmask 31744
        %v773 = vsel %vm771, %v576, 0
        %v776 = vsel %vm771, %v579, 0
        %v779 = vsel %vm771, %v582, 0
        %v782 = vsel %vm771, %v585, 0
        %v785 = vsel %vm771, %v588, 0
        %v788 = vsel %vm771, %v591, 0
        %v791 = vsel %vm771, %v594, 0
        %v794 = vsel %vm771, %v597, 0
        %v797 = vsel %vm771, %v600, 0
        %v800 = vsel %vm771, %v603, 0
        %v803 = vsel %vm771, %v606, 0
        %v806 = vsel %vm771, %v609, 0
        %v809 = vsel %vm771, %v612, 0
        %v812 = vsel %vm771, %v615, 0
        %v815 = vsel %vm771, %v618, 0
        %v818 = vsel %vm771, %v621, 0
        %v821 = vsel %vm771, %v624, 0
        %v824 = vsel %vm771, %v627, 0
        %v827 = vsel %vm771, %v630, 0
        %v830 = vsel %vm771, %v633, 0
        %v833 = vsel %vm771, %v636, 0
        %v836 = vsel %vm771, %v639, 0
        %v839 = vsel %vm771, %v642, 0
        %v842 = vsel %vm771, %v645, 0
        %v845 = vsel %vm771, %v648, 0
        %v848 = vsel %vm771, %v651, 0
        %v851 = vsel %vm771, %v654, 0
        %v854 = vsel %vm771, %v657, 0
        %v857 = vsel %vm771, %v660, 0
        %v860 = vsel %vm771, %v663, 0
        %v863 = vsel %vm771, %v666, 0
        %v866 = vsel %vm771, %v669, 0
        %vm868 = vcmask 1043456
        %v870 = vsel %vm868, %v699, 0
        %v873 = vsel %vm868, %v719, 0
        %875 = vmatpush.msra.mxu0 0.0
        %876 = vmatpush.msra.mxu0 0.0
        %877 = vmatpush.msra.mxu0 0.0
        %878 = vmatpush.msra.mxu0 0.0
        %879 = vmatpush.msra.mxu0 0.0
        %880 = vmatpush.msra.mxu0 0.0
        %881 = vmatpush.msra.mxu0 0.0
        %882 = vmatpush.msra.mxu0 0.0
        %883 = vmatpush.msra.mxu0 0.0
        %884 = vmatpush.msra.mxu0 0.0
        %885 = vmatpush.msra.mxu0 0.0
        %886 = vmatpush.msra.mxu0 0.0
        %887 = vmatpush.msra.mxu0 0.0
        %888 = vmatpush.msra.mxu0 0.0
        %889 = vmatpush.msra.mxu0 0.0
        %890 = vmatpush.msra.mxu0 %v870
        %891 = vmatmul.f32.gmra.mxu0 %v773
        %v892 = vpop.f32.mrf.mxu0
        %v893 = vadd.f32 0.0, %v892
        %894 = vmatmul.f32.gmra.mxu0 %v776
        %v895 = vpop.f32.mrf.mxu0
        %v896 = vadd.f32 0.0, %v895
        %897 = vmatmul.f32.gmra.mxu0 %v779
        %v898 = vpop.f32.mrf.mxu0
        %v899 = vadd.f32 0.0, %v898
        %900 = vmatmul.f32.gmra.mxu0 %v782
        %v901 = vpop.f32.mrf.mxu0
        %v902 = vadd.f32 0.0, %v901
        %903 = vmatmul.f32.gmra.mxu0 %v785
        %v904 = vpop.f32.mrf.mxu0
        %v905 = vadd.f32 0.0, %v904
        %906 = vmatmul.f32.gmra.mxu0 %v788
        %v907 = vpop.f32.mrf.mxu0
        %v908 = vadd.f32 0.0, %v907
        %909 = vmatmul.f32.gmra.mxu0 %v791
        %v910 = vpop.f32.mrf.mxu0
        %v911 = vadd.f32 0.0, %v910
        %912 = vmatmul.f32.gmra.mxu0 %v794
        %v913 = vpop.f32.mrf.mxu0
        %v914 = vadd.f32 0.0, %v913
        %915 = vmatmul.f32.gmra.mxu0 %v797
        %v916 = vpop.f32.mrf.mxu0
        %v917 = vadd.f32 0.0, %v916
        %918 = vmatmul.f32.gmra.mxu0 %v800
        %v919 = vpop.f32.mrf.mxu0
        %v920 = vadd.f32 0.0, %v919
        %921 = vmatmul.f32.gmra.mxu0 %v803
        %v922 = vpop.f32.mrf.mxu0
        %v923 = vadd.f32 0.0, %v922
        %924 = vmatmul.f32.gmra.mxu0 %v806
        %v925 = vpop.f32.mrf.mxu0
        %v926 = vadd.f32 0.0, %v925
        %927 = vmatmul.f32.gmra.mxu0 %v809
        %v928 = vpop.f32.mrf.mxu0
        %v929 = vadd.f32 0.0, %v928
        %930 = vmatmul.f32.gmra.mxu0 %v812
        %v931 = vpop.f32.mrf.mxu0
        %v932 = vadd.f32 0.0, %v931
        %933 = vmatmul.f32.gmra.mxu0 %v815
        %v934 = vpop.f32.mrf.mxu0
        %v935 = vadd.f32 0.0, %v934
        %936 = vmatmul.f32.gmra.mxu0 %v818
        %v937 = vpop.f32.mrf.mxu0
        %v938 = vadd.f32 0.0, %v937
        %939 = vmatmul.f32.gmra.mxu0 %v821
        %v940 = vpop.f32.mrf.mxu0
        %v941 = vadd.f32 0.0, %v940
        %942 = vmatmul.f32.gmra.mxu0 %v824
        %v943 = vpop.f32.mrf.mxu0
        %v944 = vadd.f32 0.0, %v943
        %945 = vmatmul.f32.gmra.mxu0 %v827
        %v946 = vpop.f32.mrf.mxu0
        %v947 = vadd.f32 0.0, %v946
        %948 = vmatmul.f32.gmra.mxu0 %v830
        %v949 = vpop.f32.mrf.mxu0
        %v950 = vadd.f32 0.0, %v949
        %951 = vmatmul.f32.gmra.mxu0 %v833
        %v952 = vpop.f32.mrf.mxu0
        %v953 = vadd.f32 0.0, %v952
        %954 = vmatmul.f32.gmra.mxu0 %v836
        %v955 = vpop.f32.mrf.mxu0
        %v956 = vadd.f32 0.0, %v955
        %957 = vmatmul.f32.gmra.mxu0 %v839
        %v958 = vpop.f32.mrf.mxu0
        %v959 = vadd.f32 0.0, %v958
        %960 = vmatmul.f32.gmra.mxu0 %v842
        %v961 = vpop.f32.mrf.mxu0
        %v962 = vadd.f32 0.0, %v961
        %963 = vmatmul.f32.gmra.mxu0 %v845
        %v964 = vpop.f32.mrf.mxu0
        %v965 = vadd.f32 0.0, %v964
        %966 = vmatmul.f32.gmra.mxu0 %v848
        %v967 = vpop.f32.mrf.mxu0
        %v968 = vadd.f32 0.0, %v967
        %969 = vmatmul.f32.gmra.mxu0 %v851
        %v970 = vpop.f32.mrf.mxu0
        %v971 = vadd.f32 0.0, %v970
        %972 = vmatmul.f32.gmra.mxu0 %v854
        %v973 = vpop.f32.mrf.mxu0
        %v974 = vadd.f32 0.0, %v973
        %975 = vmatmul.f32.gmra.mxu0 %v857
        %v976 = vpop.f32.mrf.mxu0
        %v977 = vadd.f32 0.0, %v976
        %978 = vmatmul.f32.gmra.mxu0 %v860
        %v979 = vpop.f32.mrf.mxu0
        %v980 = vadd.f32 0.0, %v979
        %981 = vmatmul.f32.gmra.mxu0 %v863
        %v982 = vpop.f32.mrf.mxu0
        %v983 = vadd.f32 0.0, %v982
        %984 = vmatmul.f32.gmra.mxu0 %v866
        %v985 = vpop.f32.mrf.mxu0
        %v986 = vadd.f32 0.0, %v985
        %987 = vdwg.mxu0
        %988 = vmatpush.msra.mxu0 0.0
        %989 = vmatpush.msra.mxu0 0.0
        %990 = vmatpush.msra.mxu0 0.0
        %991 = vmatpush.msra.mxu0 0.0
        %992 = vmatpush.msra.mxu0 0.0
        %993 = vmatpush.msra.mxu0 0.0
        %994 = vmatpush.msra.mxu0 0.0
        %995 = vmatpush.msra.mxu0 0.0
        %996 = vmatpush.msra.mxu0 0.0
        %997 = vmatpush.msra.mxu0 0.0
        %998 = vmatpush.msra.mxu0 0.0
        %999 = vmatpush.msra.mxu0 0.0
        %1000 = vmatpush.msra.mxu0 0.0
        %1001 = vmatpush.msra.mxu0 0.0
        %1002 = vmatpush.msra.mxu0 0.0
        %1003 = vmatpush.msra.mxu0 %v873
        %1004 = vmatmul.f32.gmra.mxu0 %v773
        %v1005 = vpop.f32.mrf.mxu0
        %v1006 = vadd.f32 0.0, %v1005
        %1007 = vmatmul.f32.gmra.mxu0 %v776
        %v1008 = vpop.f32.mrf.mxu0
        %v1009 = vadd.f32 0.0, %v1008
        %1010 = vmatmul.f32.gmra.mxu0 %v779
        %v1011 = vpop.f32.mrf.mxu0
        %v1012 = vadd.f32 0.0, %v1011
        %1013 = vmatmul.f32.gmra.mxu0 %v782
        %v1014 = vpop.f32.mrf.mxu0
        %v1015 = vadd.f32 0.0, %v1014
        %1016 = vmatmul.f32.gmra.mxu0 %v785
        %v1017 = vpop.f32.mrf.mxu0
        %v1018 = vadd.f32 0.0, %v1017
        %1019 = vmatmul.f32.gmra.mxu0 %v788
        %v1020 = vpop.f32.mrf.mxu0
        %v1021 = vadd.f32 0.0, %v1020
        %1022 = vmatmul.f32.gmra.mxu0 %v791
        %v1023 = vpop.f32.mrf.mxu0
        %v1024 = vadd.f32 0.0, %v1023
        %1025 = vmatmul.f32.gmra.mxu0 %v794
        %v1026 = vpop.f32.mrf.mxu0
        %v1027 = vadd.f32 0.0, %v1026
        %1028 = vmatmul.f32.gmra.mxu0 %v797
        %v1029 = vpop.f32.mrf.mxu0
        %v1030 = vadd.f32 0.0, %v1029
        %1031 = vmatmul.f32.gmra.mxu0 %v800
        %v1032 = vpop.f32.mrf.mxu0
        %v1033 = vadd.f32 0.0, %v1032
        %1034 = vmatmul.f32.gmra.mxu0 %v803
        %v1035 = vpop.f32.mrf.mxu0
        %v1036 = vadd.f32 0.0, %v1035
        %1037 = vmatmul.f32.gmra.mxu0 %v806
        %v1038 = vpop.f32.mrf.mxu0
        %v1039 = vadd.f32 0.0, %v1038
        %1040 = vmatmul.f32.gmra.mxu0 %v809
        %v1041 = vpop.f32.mrf.mxu0
        %v1042 = vadd.f32 0.0, %v1041
        %1043 = vmatmul.f32.gmra.mxu0 %v812
        %v1044 = vpop.f32.mrf.mxu0
        %v1045 = vadd.f32 0.0, %v1044
        %1046 = vmatmul.f32.gmra.mxu0 %v815
        %v1047 = vpop.f32.mrf.mxu0
        %v1048 = vadd.f32 0.0, %v1047
        %1049 = vmatmul.f32.gmra.mxu0 %v818
        %v1050 = vpop.f32.mrf.mxu0
        %v1051 = vadd.f32 0.0, %v1050
        %1052 = vmatmul.f32.gmra.mxu0 %v821
        %v1053 = vpop.f32.mrf.mxu0
        %v1054 = vadd.f32 0.0, %v1053
        %1055 = vmatmul.f32.gmra.mxu0 %v824
        %v1056 = vpop.f32.mrf.mxu0
        %v1057 = vadd.f32 0.0, %v1056
        %1058 = vmatmul.f32.gmra.mxu0 %v827
        %v1059 = vpop.f32.mrf.mxu0
        %v1060 = vadd.f32 0.0, %v1059
        %1061 = vmatmul.f32.gmra.mxu0 %v830
        %v1062 = vpop.f32.mrf.mxu0
        %v1063 = vadd.f32 0.0, %v1062
        %1064 = vmatmul.f32.gmra.mxu0 %v833
        %v1065 = vpop.f32.mrf.mxu0
        %v1066 = vadd.f32 0.0, %v1065
        %1067 = vmatmul.f32.gmra.mxu0 %v836
        %v1068 = vpop.f32.mrf.mxu0
        %v1069 = vadd.f32 0.0, %v1068
        %1070 = vmatmul.f32.gmra.mxu0 %v839
        %v1071 = vpop.f32.mrf.mxu0
        %v1072 = vadd.f32 0.0, %v1071
        %1073 = vmatmul.f32.gmra.mxu0 %v842
        %v1074 = vpop.f32.mrf.mxu0
        %v1075 = vadd.f32 0.0, %v1074
        %1076 = vmatmul.f32.gmra.mxu0 %v845
        %v1077 = vpop.f32.mrf.mxu0
        %v1078 = vadd.f32 0.0, %v1077
        %1079 = vmatmul.f32.gmra.mxu0 %v848
        %v1080 = vpop.f32.mrf.mxu0
        %v1081 = vadd.f32 0.0, %v1080
        %1082 = vmatmul.f32.gmra.mxu0 %v851
        %v1083 = vpop.f32.mrf.mxu0
        %v1084 = vadd.f32 0.0, %v1083
        %1085 = vmatmul.f32.gmra.mxu0 %v854
        %v1086 = vpop.f32.mrf.mxu0
        %v1087 = vadd.f32 0.0, %v1086
        %1088 = vmatmul.f32.gmra.mxu0 %v857
        %v1089 = vpop.f32.mrf.mxu0
        %v1090 = vadd.f32 0.0, %v1089
        %1091 = vmatmul.f32.gmra.mxu0 %v860
        %v1092 = vpop.f32.mrf.mxu0
        %v1093 = vadd.f32 0.0, %v1092
        %1094 = vmatmul.f32.gmra.mxu0 %v863
        %v1095 = vpop.f32.mrf.mxu0
        %v1096 = vadd.f32 0.0, %v1095
        %1097 = vmatmul.f32.gmra.mxu0 %v866
        %v1098 = vpop.f32.mrf.mxu0
        %v1099 = vadd.f32 0.0, %v1098
        %1100 = vdwg.mxu0
        %v1101 = vmax.f32 %v893, %v899
        %v1102 = vmax.f32 %v896, %v902
        %v1103 = vmax.f32 %v1101, %v905
        %v1104 = vmax.f32 %v1102, %v908
        %v1105 = vmax.f32 %v1103, %v911
        %v1106 = vmax.f32 %v1104, %v914
        %v1107 = vmax.f32 %v1105, %v917
        %v1108 = vmax.f32 %v1106, %v920
        %v1109 = vmax.f32 %v1107, %v923
        %v1110 = vmax.f32 %v1108, %v926
        %v1111 = vmax.f32 %v1109, %v929
        %v1112 = vmax.f32 %v1110, %v932
        %v1113 = vmax.f32 %v1111, %v935
        %v1114 = vmax.f32 %v1112, %v938
        %v1115 = vmax.f32 %v1113, %v941
        %v1116 = vmax.f32 %v1114, %v944
        %v1117 = vmax.f32 %v1115, %v947
        %v1118 = vmax.f32 %v1116, %v950
        %v1119 = vmax.f32 %v1117, %v953
        %v1120 = vmax.f32 %v1118, %v956
        %v1121 = vmax.f32 %v1119, %v959
        %v1122 = vmax.f32 %v1120, %v962
        %v1123 = vmax.f32 %v1121, %v965
        %v1124 = vmax.f32 %v1122, %v968
        %v1125 = vmax.f32 %v1123, %v971
        %v1126 = vmax.f32 %v1124, %v974
        %v1127 = vmax.f32 %v1125, %v977
        %v1128 = vmax.f32 %v1126, %v980
        %v1129 = vmax.f32 %v1127, %v983
        %v1130 = vmax.f32 %v1128, %v986
        %v1131 = vmax.f32 %v1129, %v1130
        %v1132 = vrot.slane %v1131, 4
        %v1133 = vmax.f32 %v1131, %v1132
        %v1134 = vrot.slane %v1133, 2
        %v1135 = vmax.f32 %v1133, %v1134
        %v1136 = vrot.slane %v1135, 1
        %v1137 = vmax.f32 %v1135, %v1136
        %v1138 = vmax.f32 %v1006, %v1012
        %v1139 = vmax.f32 %v1009, %v1015
        %v1140 = vmax.f32 %v1138, %v1018
        %v1141 = vmax.f32 %v1139, %v1021
        %v1142 = vmax.f32 %v1140, %v1024
        %v1143 = vmax.f32 %v1141, %v1027
        %v1144 = vmax.f32 %v1142, %v1030
        %v1145 = vmax.f32 %v1143, %v1033
        %v1146 = vmax.f32 %v1144, %v1036
        %v1147 = vmax.f32 %v1145, %v1039
        %v1148 = vmax.f32 %v1146, %v1042
        %v1149 = vmax.f32 %v1147, %v1045
        %v1150 = vmax.f32 %v1148, %v1048
        %v1151 = vmax.f32 %v1149, %v1051
        %v1152 = vmax.f32 %v1150, %v1054
        %v1153 = vmax.f32 %v1151, %v1057
        %v1154 = vmax.f32 %v1152, %v1060
        %v1155 = vmax.f32 %v1153, %v1063
        %v1156 = vmax.f32 %v1154, %v1066
        %v1157 = vmax.f32 %v1155, %v1069
        %v1158 = vmax.f32 %v1156, %v1072
        %v1159 = vmax.f32 %v1157, %v1075
        %v1160 = vmax.f32 %v1158, %v1078
        %v1161 = vmax.f32 %v1159, %v1081
        %v1162 = vmax.f32 %v1160, %v1084
        %v1163 = vmax.f32 %v1161, %v1087
        %v1164 = vmax.f32 %v1162, %v1090
        %v1165 = vmax.f32 %v1163, %v1093
        %v1166 = vmax.f32 %v1164, %v1096
        %v1167 = vmax.f32 %v1165, %v1099
        %v1168 = vmax.f32 %v1166, %v1167
        %v1169 = vrot.slane %v1168, 4
        %v1170 = vmax.f32 %v1168, %v1169
        %v1171 = vrot.slane %v1170, 2
        %v1172 = vmax.f32 %v1170, %v1171
        %v1173 = vrot.slane %v1172, 1
        %v1174 = vmax.f32 %v1172, %v1173
        %v1175 = vsub.f32 %v893, %v1137
        %v1176 = vsub.f32 %v1006, %v1174
        %v1177 = vsub.f32 %v896, %v1137
        %v1178 = vsub.f32 %v1009, %v1174
        %v1179 = vsub.f32 %v899, %v1137
        %v1180 = vsub.f32 %v1012, %v1174
        %v1181 = vsub.f32 %v902, %v1137
        %v1182 = vsub.f32 %v1015, %v1174
        %v1183 = vsub.f32 %v905, %v1137
        %v1184 = vsub.f32 %v1018, %v1174
        %v1185 = vsub.f32 %v908, %v1137
        %v1186 = vsub.f32 %v1021, %v1174
        %v1187 = vsub.f32 %v911, %v1137
        %v1188 = vsub.f32 %v1024, %v1174
        %v1189 = vsub.f32 %v914, %v1137
        %v1190 = vsub.f32 %v1027, %v1174
        %v1191 = vsub.f32 %v917, %v1137
        %v1192 = vsub.f32 %v1030, %v1174
        %v1193 = vsub.f32 %v920, %v1137
        %v1194 = vsub.f32 %v1033, %v1174
        %v1195 = vsub.f32 %v923, %v1137
        %v1196 = vsub.f32 %v1036, %v1174
        %v1197 = vsub.f32 %v926, %v1137
        %v1198 = vsub.f32 %v1039, %v1174
        %v1199 = vsub.f32 %v929, %v1137
        %v1200 = vsub.f32 %v1042, %v1174
        %v1201 = vsub.f32 %v932, %v1137
        %v1202 = vsub.f32 %v1045, %v1174
        %v1203 = vsub.f32 %v935, %v1137
        %v1204 = vsub.f32 %v1048, %v1174
        %v1205 = vsub.f32 %v938, %v1137
        %v1206 = vsub.f32 %v1051, %v1174
        %v1207 = vsub.f32 %v941, %v1137
        %v1208 = vsub.f32 %v1054, %v1174
        %v1209 = vsub.f32 %v944, %v1137
        %v1210 = vsub.f32 %v1057, %v1174
        %v1211 = vsub.f32 %v947, %v1137
        %v1212 = vsub.f32 %v1060, %v1174
        %v1213 = vsub.f32 %v950, %v1137
        %v1214 = vsub.f32 %v1063, %v1174
        %v1215 = vsub.f32 %v953, %v1137
        %v1216 = vsub.f32 %v1066, %v1174
        %v1217 = vsub.f32 %v956, %v1137
        %v1218 = vsub.f32 %v1069, %v1174
        %v1219 = vsub.f32 %v959, %v1137
        %v1220 = vsub.f32 %v1072, %v1174
        %v1221 = vsub.f32 %v962, %v1137
        %v1222 = vsub.f32 %v1075, %v1174
        %v1223 = vsub.f32 %v965, %v1137
        %v1224 = vsub.f32 %v1078, %v1174
        %v1225 = vsub.f32 %v968, %v1137
        %v1226 = vsub.f32 %v1081, %v1174
        %v1227 = vsub.f32 %v971, %v1137
        %v1228 = vsub.f32 %v1084, %v1174
        %v1229 = vsub.f32 %v974, %v1137
        %v1230 = vsub.f32 %v1087, %v1174
        %v1231 = vsub.f32 %v977, %v1137
        %v1232 = vsub.f32 %v1090, %v1174
        %v1233 = vsub.f32 %v980, %v1137
        %v1234 = vsub.f32 %v1093, %v1174
        %v1235 = vsub.f32 %v983, %v1137
        %v1236 = vsub.f32 %v1096, %v1174
        %v1237 = vsub.f32 %v986, %v1137
        %v1238 = vsub.f32 %v1099, %v1174
        %v1239 = vmul.f32 %v1175, 1.442695
        %v1240 = vpow.pop %v1239
        %v1241 = vmul.f32 %v1176, 1.442695
        %v1242 = vpow.pop %v1241
        %v1243 = vmul.f32 %v1177, 1.442695
        %v1244 = vpow.pop %v1243
        %v1245 = vmul.f32 %v1178, 1.442695
        %v1246 = vpow.pop %v1245
        %v1247 = vmul.f32 %v1179, 1.442695
        %v1248 = vpow.pop %v1247
        %v1249 = vmul.f32 %v1180, 1.442695
        %v1250 = vpow.pop %v1249
        %v1251 = vmul.f32 %v1181, 1.442695
        %v1252 = vpow.pop %v1251
        %v1253 = vmul.f32 %v1182, 1.442695
        %v1254 = vpow.pop %v1253
        %v1255 = vmul.f32 %v1183, 1.442695
        %v1256 = vpow.pop %v1255
        %v1257 = vmul.f32 %v1184, 1.442695
        %v1258 = vpow.pop %v1257
        %v1259 = vmul.f32 %v1185, 1.442695
        %v1260 = vpow.pop %v1259
        %v1261 = vmul.f32 %v1186, 1.442695
        %v1262 = vpow.pop %v1261
        %v1263 = vmul.f32 %v1187, 1.442695
        %v1264 = vpow.pop %v1263
        %v1265 = vmul.f32 %v1188, 1.442695
        %v1266 = vpow.pop %v1265
        %v1267 = vmul.f32 %v1189, 1.442695
        %v1268 = vpow.pop %v1267
        %v1269 = vmul.f32 %v1190, 1.442695
        %v1270 = vpow.pop %v1269
        %v1271 = vmul.f32 %v1191, 1.442695
        %v1272 = vpow.pop %v1271
        %v1273 = vmul.f32 %v1192, 1.442695
        %v1274 = vpow.pop %v1273
        %v1275 = vmul.f32 %v1193, 1.442695
        %v1276 = vpow.pop %v1275
        %v1277 = vmul.f32 %v1194, 1.442695
        %v1278 = vpow.pop %v1277
        %v1279 = vmul.f32 %v1195, 1.442695
        %v1280 = vpow.pop %v1279
        %v1281 = vmul.f32 %v1196, 1.442695
        %v1282 = vpow.pop %v1281
        %v1283 = vmul.f32 %v1197, 1.442695
        %v1284 = vpow.pop %v1283
        %v1285 = vmul.f32 %v1198, 1.442695
        %v1286 = vpow.pop %v1285
        %v1287 = vmul.f32 %v1199, 1.442695
        %v1288 = vpow.pop %v1287
        %v1289 = vmul.f32 %v1200, 1.442695
        %v1290 = vpow.pop %v1289
        %v1291 = vmul.f32 %v1201, 1.442695
        %v1292 = vpow.pop %v1291
        %v1293 = vmul.f32 %v1202, 1.442695
        %v1294 = vpow.pop %v1293
        %v1295 = vmul.f32 %v1203, 1.442695
        %v1296 = vpow.pop %v1295
        %v1297 = vmul.f32 %v1204, 1.442695
        %v1298 = vpow.pop %v1297
        %v1299 = vmul.f32 %v1205, 1.442695
        %v1300 = vpow.pop %v1299
        %v1301 = vmul.f32 %v1206, 1.442695
        %v1302 = vpow.pop %v1301
        %v1303 = vmul.f32 %v1207, 1.442695
        %v1304 = vpow.pop %v1303
        %v1305 = vmul.f32 %v1208, 1.442695
        %v1306 = vpow.pop %v1305
        %v1307 = vmul.f32 %v1209, 1.442695
        %v1308 = vpow.pop %v1307
        %v1309 = vmul.f32 %v1210, 1.442695
        %v1310 = vpow.pop %v1309
        %v1311 = vmul.f32 %v1211, 1.442695
        %v1312 = vpow.pop %v1311
        %v1313 = vmul.f32 %v1212, 1.442695
        %v1314 = vpow.pop %v1313
        %v1315 = vmul.f32 %v1213, 1.442695
        %v1316 = vpow.pop %v1315
        %v1317 = vmul.f32 %v1214, 1.442695
        %v1318 = vpow.pop %v1317
        %v1319 = vmul.f32 %v1215, 1.442695
        %v1320 = vpow.pop %v1319
        %v1321 = vmul.f32 %v1216, 1.442695
        %v1322 = vpow.pop %v1321
        %v1323 = vmul.f32 %v1217, 1.442695
        %v1324 = vpow.pop %v1323
        %v1325 = vmul.f32 %v1218, 1.442695
        %v1326 = vpow.pop %v1325
        %v1327 = vmul.f32 %v1219, 1.442695
        %v1328 = vpow.pop %v1327
        %v1329 = vmul.f32 %v1220, 1.442695
        %v1330 = vpow.pop %v1329
        %v1331 = vmul.f32 %v1221, 1.442695
        %v1332 = vpow.pop %v1331
        %v1333 = vmul.f32 %v1222, 1.442695
        %v1334 = vpow.pop %v1333
        %v1335 = vmul.f32 %v1223, 1.442695
        %v1336 = vpow.pop %v1335
        %v1337 = vmul.f32 %v1224, 1.442695
        %v1338 = vpow.pop %v1337
        %v1339 = vmul.f32 %v1225, 1.442695
        %v1340 = vpow.pop %v1339
        %v1341 = vmul.f32 %v1226, 1.442695
        %v1342 = vpow.pop %v1341
        %v1343 = vmul.f32 %v1227, 1.442695
        %v1344 = vpow.pop %v1343
        %v1345 = vmul.f32 %v1228, 1.442695
        %v1346 = vpow.pop %v1345
        %v1347 = vmul.f32 %v1229, 1.442695
        %v1348 = vpow.pop %v1347
        %v1349 = vmul.f32 %v1230, 1.442695
        %v1350 = vpow.pop %v1349
        %v1351 = vmul.f32 %v1231, 1.442695
        %v1352 = vpow.pop %v1351
        %v1353 = vmul.f32 %v1232, 1.442695
        %v1354 = vpow.pop %v1353
        %v1355 = vmul.f32 %v1233, 1.442695
        %v1356 = vpow.pop %v1355
        %v1357 = vmul.f32 %v1234, 1.442695
        %v1358 = vpow.pop %v1357
        %v1359 = vmul.f32 %v1235, 1.442695
        %v1360 = vpow.pop %v1359
        %v1361 = vmul.f32 %v1236, 1.442695
        %v1362 = vpow.pop %v1361
        %v1363 = vmul.f32 %v1237, 1.442695
        %v1364 = vpow.pop %v1363
        %v1365 = vmul.f32 %v1238, 1.442695
        %v1366 = vpow.pop %v1365
        %v1367 = vadd.f32 %v1240, %v1244
        %v1368 = vadd.f32 %v1367, %v1248
        %v1369 = vadd.f32 %v1368, %v1252
        %v1370 = vadd.f32 %v1369, %v1256
        %v1371 = vadd.f32 %v1370, %v1260
        %v1372 = vadd.f32 %v1371, %v1264
        %v1373 = vadd.f32 %v1372, %v1268
        %v1374 = vadd.f32 %v1373, %v1272
        %v1375 = vadd.f32 %v1374, %v1276
        %v1376 = vadd.f32 %v1375, %v1280
        %v1377 = vadd.f32 %v1376, %v1284
        %v1378 = vadd.f32 %v1377, %v1288
        %v1379 = vadd.f32 %v1378, %v1292
        %v1380 = vadd.f32 %v1379, %v1296
        %v1381 = vadd.f32 %v1380, %v1300
        %v1382 = vadd.f32 %v1381, %v1304
        %v1383 = vadd.f32 %v1382, %v1308
        %v1384 = vadd.f32 %v1383, %v1312
        %v1385 = vadd.f32 %v1384, %v1316
        %v1386 = vadd.f32 %v1385, %v1320
        %v1387 = vadd.f32 %v1386, %v1324
        %v1388 = vadd.f32 %v1387, %v1328
        %v1389 = vadd.f32 %v1388, %v1332
        %v1390 = vadd.f32 %v1389, %v1336
        %v1391 = vadd.f32 %v1390, %v1340
        %v1392 = vadd.f32 %v1391, %v1344
        %v1393 = vadd.f32 %v1392, %v1348
        %v1394 = vadd.f32 %v1393, %v1352
        %v1395 = vadd.f32 %v1394, %v1356
        %v1396 = vadd.f32 %v1395, %v1360
        %v1397 = vadd.f32 %v1396, %v1364
        %v1398 = vrot.slane %v1397, 4
        %v1399 = vadd.f32 %v1397, %v1398
        %v1400 = vrot.slane %v1399, 2
        %v1401 = vadd.f32 %v1399, %v1400
        %v1402 = vrot.slane %v1401, 1
        %v1403 = vadd.f32 %v1401, %v1402
        %v1404 = vadd.f32 %v1242, %v1246
        %v1405 = vadd.f32 %v1404, %v1250
        %v1406 = vadd.f32 %v1405, %v1254
        %v1407 = vadd.f32 %v1406, %v1258
        %v1408 = vadd.f32 %v1407, %v1262
        %v1409 = vadd.f32 %v1408, %v1266
        %v1410 = vadd.f32 %v1409, %v1270
        %v1411 = vadd.f32 %v1410, %v1274
        %v1412 = vadd.f32 %v1411, %v1278
        %v1413 = vadd.f32 %v1412, %v1282
        %v1414 = vadd.f32 %v1413, %v1286
        %v1415 = vadd.f32 %v1414, %v1290
        %v1416 = vadd.f32 %v1415, %v1294
        %v1417 = vadd.f32 %v1416, %v1298
        %v1418 = vadd.f32 %v1417, %v1302
        %v1419 = vadd.f32 %v1418, %v1306
        %v1420 = vadd.f32 %v1419, %v1310
        %v1421 = vadd.f32 %v1420, %v1314
        %v1422 = vadd.f32 %v1421, %v1318
        %v1423 = vadd.f32 %v1422, %v1322
        %v1424 = vadd.f32 %v1423, %v1326
        %v1425 = vadd.f32 %v1424, %v1330
        %v1426 = vadd.f32 %v1425, %v1334
        %v1427 = vadd.f32 %v1426, %v1338
        %v1428 = vadd.f32 %v1427, %v1342
        %v1429 = vadd.f32 %v1428, %v1346
        %v1430 = vadd.f32 %v1429, %v1350
        %v1431 = vadd.f32 %v1430, %v1354
        %v1432 = vadd.f32 %v1431, %v1358
        %v1433 = vadd.f32 %v1432, %v1362
        %v1434 = vadd.f32 %v1433, %v1366
        %v1435 = vrot.slane %v1434, 4
        %v1436 = vadd.f32 %v1434, %v1435
        %v1437 = vrot.slane %v1436, 2
        %v1438 = vadd.f32 %v1436, %v1437
        %v1439 = vrot.slane %v1438, 1
        %v1440 = vadd.f32 %v1438, %v1439
        %v1441 = vrcp.pop %v1403
        %v1442 = vmul.f32 %v1403, %v1441
        %v1443 = vsub.f32 1.0, %v1442
        %v1444 = vmul.f32 %v1441, %v1443
        %v1445 = vadd.f32 %v1441, %v1444
        %vm1446 = vweird.f32 %v1403
        %vm1447 = vweird.f32 %v1441
        %vm1448 = vmor %vm1446, %vm1447
        %v1449 = vsel %vm1448, %v1441, %v1445
        %v1450 = vand.u32 2147483647, %v1403
        %vm1451 = vcmp.eq.f32.partialorder %v1450, 8.507059e+37
        %v1452 = vand.u32 %v1403, 2147483648
        %v1453 = vor.u32 1.1754944e-38, %v1452
        %v1454 = vsel %vm1451, %v1453, %v1449
        %v1455 = vmul.f32 1.0, %v1454
        %v1456 = vrcp.pop %v1440
        %v1457 = vmul.f32 %v1440, %v1456
        %v1458 = vsub.f32 1.0, %v1457
        %v1459 = vmul.f32 %v1456, %v1458
        %v1460 = vadd.f32 %v1456, %v1459
        %vm1461 = vweird.f32 %v1440
        %vm1462 = vweird.f32 %v1456
        %vm1463 = vmor %vm1461, %vm1462
        %v1464 = vsel %vm1463, %v1456, %v1460
        %v1465 = vand.u32 2147483647, %v1440
        %vm1466 = vcmp.eq.f32.partialorder %v1465, 8.507059e+37
        %v1467 = vand.u32 %v1440, 2147483648
        %v1468 = vor.u32 1.1754944e-38, %v1467
        %v1469 = vsel %vm1466, %v1468, %v1464
        %v1470 = vmul.f32 1.0, %v1469
        %v1471 = vmul.f32 %v1240, %v1455
        %v1472 = vmul.f32 %v1242, %v1470
        %v1473 = vmul.f32 %v1244, %v1455
        %v1474 = vmul.f32 %v1246, %v1470
        %v1475 = vmul.f32 %v1248, %v1455
        %v1476 = vmul.f32 %v1250, %v1470
        %v1477 = vmul.f32 %v1252, %v1455
        %v1478 = vmul.f32 %v1254, %v1470
        %v1479 = vmul.f32 %v1256, %v1455
        %v1480 = vmul.f32 %v1258, %v1470
        %v1481 = vmul.f32 %v1260, %v1455
        %v1482 = vmul.f32 %v1262, %v1470
        %v1483 = vmul.f32 %v1264, %v1455
        %v1484 = vmul.f32 %v1266, %v1470
        %v1485 = vmul.f32 %v1268, %v1455
        %v1486 = vmul.f32 %v1270, %v1470
        %v1487 = vmul.f32 %v1272, %v1455
        %v1488 = vmul.f32 %v1274, %v1470
        %v1489 = vmul.f32 %v1276, %v1455
        %v1490 = vmul.f32 %v1278, %v1470
        %v1491 = vmul.f32 %v1280, %v1455
        %v1492 = vmul.f32 %v1282, %v1470
        %v1493 = vmul.f32 %v1284, %v1455
        %v1494 = vmul.f32 %v1286, %v1470
        %v1495 = vmul.f32 %v1288, %v1455
        %v1496 = vmul.f32 %v1290, %v1470
        %v1497 = vmul.f32 %v1292, %v1455
        %v1498 = vmul.f32 %v1294, %v1470
        %v1499 = vmul.f32 %v1296, %v1455
        %v1500 = vmul.f32 %v1298, %v1470
        %v1501 = vmul.f32 %v1300, %v1455
        %v1502 = vmul.f32 %v1302, %v1470
        %v1503 = vmul.f32 %v1304, %v1455
        %v1504 = vmul.f32 %v1306, %v1470
        %v1505 = vmul.f32 %v1308, %v1455
        %v1506 = vmul.f32 %v1310, %v1470
        %v1507 = vmul.f32 %v1312, %v1455
        %v1508 = vmul.f32 %v1314, %v1470
        %v1509 = vmul.f32 %v1316, %v1455
        %v1510 = vmul.f32 %v1318, %v1470
        %v1511 = vmul.f32 %v1320, %v1455
        %v1512 = vmul.f32 %v1322, %v1470
        %v1513 = vmul.f32 %v1324, %v1455
        %v1514 = vmul.f32 %v1326, %v1470
        %v1515 = vmul.f32 %v1328, %v1455
        %v1516 = vmul.f32 %v1330, %v1470
        %v1517 = vmul.f32 %v1332, %v1455
        %v1518 = vmul.f32 %v1334, %v1470
        %v1519 = vmul.f32 %v1336, %v1455
        %v1520 = vmul.f32 %v1338, %v1470
        %v1521 = vmul.f32 %v1340, %v1455
        %v1522 = vmul.f32 %v1342, %v1470
        %v1523 = vmul.f32 %v1344, %v1455
        %v1524 = vmul.f32 %v1346, %v1470
        %v1525 = vmul.f32 %v1348, %v1455
        %v1526 = vmul.f32 %v1350, %v1470
        %v1527 = vmul.f32 %v1352, %v1455
        %v1528 = vmul.f32 %v1354, %v1470
        %v1529 = vmul.f32 %v1356, %v1455
        %v1530 = vmul.f32 %v1358, %v1470
        %v1531 = vmul.f32 %v1360, %v1455
        %v1532 = vmul.f32 %v1362, %v1470
        %v1533 = vmul.f32 %v1364, %v1455
        %v1534 = vmul.f32 %v1366, %v1470
        %1535 = vmatpush.msra.mxu0 %v1501
        %1536 = vmatpush.msra.mxu0 %v1499
        %1537 = vmatpush.msra.mxu0 %v1497
        %1538 = vmatpush.msra.mxu0 %v1495
        %1539 = vmatpush.msra.mxu0 %v1493
        %1540 = vmatpush.msra.mxu0 %v1491
        %1541 = vmatpush.msra.mxu0 %v1489
        %1542 = vmatpush.msra.mxu0 %v1487
        %1543 = vmatpush.msra.mxu0 %v1485
        %1544 = vmatpush.msra.mxu0 %v1483
        %1545 = vmatpush.msra.mxu0 %v1481
        %1546 = vmatpush.msra.mxu0 %v1479
        %1547 = vmatpush.msra.mxu0 %v1477
        %1548 = vmatpush.msra.mxu0 %v1475
        %1549 = vmatpush.msra.mxu0 %v1473
        %1550 = vmatpush.msra.mxu0 %v1471
        %1551 = vmatmul.f32.gmra.mxu0 %v749
        %v1552 = vpop.f32.mrf.mxu0
        %v1553 = vadd.f32 0.0, %v1552
        %1554 = vdwg.mxu0
        %1555 = vmatpush.msra.mxu0 %v1533
        %1556 = vmatpush.msra.mxu0 %v1531
        %1557 = vmatpush.msra.mxu0 %v1529
        %1558 = vmatpush.msra.mxu0 %v1527
        %1559 = vmatpush.msra.mxu0 %v1525
        %1560 = vmatpush.msra.mxu0 %v1523
        %1561 = vmatpush.msra.mxu0 %v1521
        %1562 = vmatpush.msra.mxu0 %v1519
        %1563 = vmatpush.msra.mxu0 %v1517
        %1564 = vmatpush.msra.mxu0 %v1515
        %1565 = vmatpush.msra.mxu0 %v1513
        %1566 = vmatpush.msra.mxu0 %v1511
        %1567 = vmatpush.msra.mxu0 %v1509
        %1568 = vmatpush.msra.mxu0 %v1507
        %1569 = vmatpush.msra.mxu0 %v1505
        %1570 = vmatpush.msra.mxu0 %v1503
        %1571 = vmatmul.f32.gmra.mxu0 %v769
        %v1572 = vpop.f32.mrf.mxu0
        %v1573 = vadd.f32 %v1553, %v1572
        %1574 = vdwg.mxu0
        %1575 = vmatpush.msra.mxu0 %v1502
        %1576 = vmatpush.msra.mxu0 %v1500
        %1577 = vmatpush.msra.mxu0 %v1498
        %1578 = vmatpush.msra.mxu0 %v1496
        %1579 = vmatpush.msra.mxu0 %v1494
        %1580 = vmatpush.msra.mxu0 %v1492
        %1581 = vmatpush.msra.mxu0 %v1490
        %1582 = vmatpush.msra.mxu0 %v1488
        %1583 = vmatpush.msra.mxu0 %v1486
        %1584 = vmatpush.msra.mxu0 %v1484
        %1585 = vmatpush.msra.mxu0 %v1482
        %1586 = vmatpush.msra.mxu0 %v1480
        %1587 = vmatpush.msra.mxu0 %v1478
        %1588 = vmatpush.msra.mxu0 %v1476
        %1589 = vmatpush.msra.mxu0 %v1474
        %1590 = vmatpush.msra.mxu0 %v1472
        %1591 = vmatmul.f32.gmra.mxu0 %v749
        %v1592 = vpop.f32.mrf.mxu0
        %v1593 = vadd.f32 0.0, %v1592
        %1594 = vdwg.mxu0
        %1595 = vmatpush.msra.mxu0 %v1534
        %1596 = vmatpush.msra.mxu0 %v1532
        %1597 = vmatpush.msra.mxu0 %v1530
        %1598 = vmatpush.msra.mxu0 %v1528
        %1599 = vmatpush.msra.mxu0 %v1526
        %1600 = vmatpush.msra.mxu0 %v1524
        %1601 = vmatpush.msra.mxu0 %v1522
        %1602 = vmatpush.msra.mxu0 %v1520
        %1603 = vmatpush.msra.mxu0 %v1518
        %1604 = vmatpush.msra.mxu0 %v1516
        %1605 = vmatpush.msra.mxu0 %v1514
        %1606 = vmatpush.msra.mxu0 %v1512
        %1607 = vmatpush.msra.mxu0 %v1510
        %1608 = vmatpush.msra.mxu0 %v1508
        %1609 = vmatpush.msra.mxu0 %v1506
        %1610 = vmatpush.msra.mxu0 %v1504
        %1611 = vmatmul.f32.gmra.mxu0 %v769
        %v1612 = vpop.f32.mrf.mxu0
        %v1613 = vadd.f32 %v1593, %v1612
        %1614 = vdwg.mxu0
        %v1615 = vld [vmem:[%s7] sm:$0xff]
        %v1616 = vld [vmem:[%s7 + $0x8] sm:$0xff]
        %v1617 = vld [vmem:[%s7 + $0x10] sm:$0xff]
        %v1618 = vld [vmem:[%s7 + $0x18] sm:$0xff]
        %v1619 = vld [vmem:[%s8] sm:$0xff]
        %v1620 = vld [vmem:[%s8 + $0x8] sm:$0xff]
        %v1621 = vld [vmem:[%s8 + $0x10] sm:$0xff]
        %v1622 = vld [vmem:[%s8 + $0x18] sm:$0xff]
        %1624 = vset.pattern.permute.xlu0 0
        %1625 = vperm.xlu0 %1624, %v1619
        %v1626 = vpop.permute.xlu0 %1625
        %1629 = vset.pattern.permute.xlu0 0
        %1630 = vperm.xlu0 %1629, %v1620
        %v1631 = vpop.permute.xlu0 %1630
        %1634 = vset.pattern.permute.xlu0 0
        %1635 = vperm.xlu0 %1634, %v1621
        %v1636 = vpop.permute.xlu0 %1635
        %1639 = vset.pattern.permute.xlu0 0
        %1640 = vperm.xlu0 %1639, %v1622
        %v1641 = vpop.permute.xlu0 %1640
        %v1644 = vsel %vm771, %v1615, 0
        %v1647 = vsel %vm771, %v1616, 0
        %v1650 = vsel %vm771, %v1617, 0
        %v1653 = vsel %vm771, %v1618, 0
        %v1656 = vsel %vm868, %v1573, 0
        %v1659 = vsel %vm868, %v1613, 0
        %1661 = vmatpush.msra.mxu0 0.0
        %1662 = vmatpush.msra.mxu0 0.0
        %1663 = vmatpush.msra.mxu0 0.0
        %1664 = vmatpush.msra.mxu0 0.0
        %1665 = vmatpush.msra.mxu0 0.0
        %1666 = vmatpush.msra.mxu0 0.0
        %1667 = vmatpush.msra.mxu0 0.0
        %1668 = vmatpush.msra.mxu0 0.0
        %1669 = vmatpush.msra.mxu0 0.0
        %1670 = vmatpush.msra.mxu0 0.0
        %1671 = vmatpush.msra.mxu0 0.0
        %1672 = vmatpush.msra.mxu0 0.0
        %1673 = vmatpush.msra.mxu0 0.0
        %1674 = vmatpush.msra.mxu0 0.0
        %1675 = vmatpush.msra.mxu0 0.0
        %1676 = vmatpush.msra.mxu0 %v1656
        %1677 = vmatmul.f32.gmra.mxu0 %v1644
        %v1678 = vpop.f32.mrf.mxu0
        %v1679 = vadd.f32 %v1626, %v1678
        %1680 = vmatmul.f32.gmra.mxu0 %v1647
        %v1681 = vpop.f32.mrf.mxu0
        %v1682 = vadd.f32 %v1631, %v1681
        %1683 = vmatmul.f32.gmra.mxu0 %v1650
        %v1684 = vpop.f32.mrf.mxu0
        %v1685 = vadd.f32 %v1636, %v1684
        %1686 = vmatmul.f32.gmra.mxu0 %v1653
        %v1687 = vpop.f32.mrf.mxu0
        %v1688 = vadd.f32 %v1641, %v1687
        %1689 = vdwg.mxu0
        %1690 = vmatpush.msra.mxu0 0.0
        %1691 = vmatpush.msra.mxu0 0.0
        %1692 = vmatpush.msra.mxu0 0.0
        %1693 = vmatpush.msra.mxu0 0.0
        %1694 = vmatpush.msra.mxu0 0.0
        %1695 = vmatpush.msra.mxu0 0.0
        %1696 = vmatpush.msra.mxu0 0.0
        %1697 = vmatpush.msra.mxu0 0.0
        %1698 = vmatpush.msra.mxu0 0.0
        %1699 = vmatpush.msra.mxu0 0.0
        %1700 = vmatpush.msra.mxu0 0.0
        %1701 = vmatpush.msra.mxu0 0.0
        %1702 = vmatpush.msra.mxu0 0.0
        %1703 = vmatpush.msra.mxu0 0.0
        %1704 = vmatpush.msra.mxu0 0.0
        %1705 = vmatpush.msra.mxu0 %v1659
        %1706 = vmatmul.f32.gmra.mxu0 %v1644
        %v1707 = vpop.f32.mrf.mxu0
        %v1708 = vadd.f32 %v1626, %v1707
        %1709 = vmatmul.f32.gmra.mxu0 %v1647
        %v1710 = vpop.f32.mrf.mxu0
        %v1711 = vadd.f32 %v1631, %v1710
        %1712 = vmatmul.f32.gmra.mxu0 %v1650
        %v1713 = vpop.f32.mrf.mxu0
        %v1714 = vadd.f32 %v1636, %v1713
        %1715 = vmatmul.f32.gmra.mxu0 %v1653
        %v1716 = vpop.f32.mrf.mxu0
        %v1717 = vadd.f32 %v1641, %v1716
        %1718 = vdwg.mxu0
        %v1719 = vadd.f32 %v1679, %v381
        %v1720 = vadd.f32 %v1708, %v382
        %v1721 = vadd.f32 %v1682, %v383
        %v1722 = vadd.f32 %v1711, %v384
        %v1723 = vadd.f32 %v1685, %v385
        %v1724 = vadd.f32 %v1714, %v386
        %v1725 = vadd.f32 %v1688, %v387
        %v1726 = vadd.f32 %v1717, %v388
        %1727 = vst [vmem:[%s366] sm:$0xff] %v1719
        %1728 = vst [vmem:[%s366 + $0x8] sm:$0xff] %v1720
        %1729 = vst [vmem:[%s366 + $0x10] sm:$0xff] %v1721
        %1730 = vst [vmem:[%s366 + $0x18] sm:$0xff] %v1722
        %1731 = vst [vmem:[%s366 + $0x20] sm:$0xff] %v1723
        %1732 = vst [vmem:[%s366 + $0x28] sm:$0xff] %v1724
        %1733 = vst [vmem:[%s366 + $0x30] sm:$0xff] %v1725
        %1734 = vst [vmem:[%s366 + $0x38] sm:$0xff] %v1726
        %s1735 = sand.u32 %s242, 1
        %s1736 = scalar_lea.sflag [#allocation4], %s1735
        %s1737 = sand.u32 %s242, 1
        %s1738 = smul.addr %s1737, 64
        %s1739 = scalar_lea.vmem [#allocation5], %s1738
        // Predicated region
        $region61: #{tpu_custom_call.1} parent=55 // pred_check
          %p1740 = pneg %p252
        $region62: #{tpu_custom_call.1} parent=55 // pred_check_branch
          %1742 = sbr.rel (%p1740) target = $region64
        $region63: #{tpu_custom_call.1} parent=55 // pred_region
          %s1743 = smul.u32 2, %s31
          %1745 = vsyncadd %s1736, 0
          %s1746 = smul.addr %s30, 8
          %s1747 = sadd.s32 %s1743, %s1746
          %s1748 = smul.addr %s1747, 8
          %s1749 = scalar_lea.hbm %s9, %s1748
          %s1750 = sshll.u32 %s1739, 4
          %s1751 = int_to_ptr.vmem [resolvable:$true] %s1750
          %s1752 = sshll.u32 %s1749, 4
          %s1753 = int_to_ptr.hbm [resolvable:$true] %s1752
          %1758 = dma.vmem_to_hbm [thread:$0]  %s1751, 1024, %s1753, %s1736, 256, 256, 16
        $region64: #{tpu_custom_call.1} parent=55 // pred_fallthru
          _
      $region56: #{tpu_custom_call.1} parent=5 // pred_fallthru
        _
      %p1759 = scmp.le.s32.totalorder 2, %s21
      // Predicated region
      $region65: #{tpu_custom_call.1} parent=5 // pred_check
        %p1760 = pneg %p1759
      $region66: #{tpu_custom_call.1} parent=5 // pred_check_branch
        %1762 = sbr.rel (%p1760) target = $region68
      $region67: #{tpu_custom_call.1} parent=5 // pred_region
        %s1763 = ssub.s32 %s21, 2
        // Predicated region
        $region69: #{tpu_custom_call.1} parent=67 // pred_check
          %p1764 = pneg %p258
        $region70: #{tpu_custom_call.1} parent=67 // pred_check_branch
          %1766 = sbr.rel (%p1764) target = $region72
        $region71: #{tpu_custom_call.1} parent=67 // pred_region
          %s1767 = sand.u32 %s243, 1
          %s1768 = scalar_lea.sflag [#allocation4], %s1767
          %s1769 = sand.u32 %s243, 1
          %s1770 = smul.addr %s1769, 64
          %s1771 = scalar_lea.vmem [#allocation5], %s1770
          %1773 = dma.done %s1768, 1024
        $region72: #{tpu_custom_call.1} parent=67 // pred_fallthru
          _
      $region68: #{tpu_custom_call.1} parent=5 // pred_fallthru
        _
    $region6: #{tpu_custom_call.1} parent=1 // loop_footer
      %s25 = sadd.s32 1, %s21
    $region7: #{tpu_custom_call.1} parent=1 // loop_footer_branch
      %20 = sbr.rel target = $region3
    $region8: #{tpu_custom_call.1} parent=1 // loop_exit
      _
    %1774 = vsyncpa [#allocation3], 1
    %s1775 = scalar_lea.sflag [#allocation3], 1
    %1776 = vsyncpa %s1775, 1
    %1777 = vsyncpa [#allocation4], 1
    %s1778 = scalar_lea.sflag [#allocation4], 1
    %1779 = vsyncpa %s1778, 1

</llo_original>
